<compile_context>
chip_gen: v7x
topology: tpu7x:2x2x1
jax: 0.10.0
libtpu: 0.0.40
codegen_flags: <defaults>
</compile_context>

<pallas_src>
import functools

import jax
import jax.numpy as jnp
from jax.experimental import pallas as pl
from jax.experimental.pallas import tpu as pltpu


def transformer_block_kernel(x_ref, xh_ref, bias_ref,
                             wfc_ref, bfc_ref,
                             g1_ref, be1_ref,
                             w1_ref, b1_ref,
                             w2_ref, b2_ref,
                             g2_ref, be2_ref,
                             out_ref, *, heads):
    """One TransformerBlock over a (Bt, S, E) batch tile (grid axis 0)."""
    Bt, S, E = x_ref.shape
    D = E // heads
    f32 = jnp.float32
    scale = 1.0 / float(E) ** 0.5
    inv_e = 1.0 / float(E)

    # ---------------- multi-head self-attention ----------------
    # Reference quirk: q = k = v = x split into heads (no q/k/v projections).
    xh = xh_ref[...]                          # (G, S, D) bf16, head-major, G=Bt*heads
    q = xh * scale                            # fold 1/sqrt(E) into q (S*D elems, not S*S)
    energy = jnp.einsum('gqd,gkd->gqk', q, xh,
                        preferred_element_type=f32)              # (G, S, S) f32
    energy = energy + bias_ref[...]           # hoisted additive mask bias (G, 1, S)
    energy = energy - jnp.max(energy, axis=-1, keepdims=True)
    p = jnp.exp(energy)
    denom = jnp.sum(p, axis=-1, keepdims=True)
    attn = p * pl.reciprocal(denom, approx=True)                 # softmax probs
    ctx = jnp.einsum('gqk,gkd->gqd', attn.astype(jnp.bfloat16), xh,
                     preferred_element_type=f32)                 # (G, S, D) f32
    ctx = ctx.reshape(Bt, heads, S, D).astype(jnp.bfloat16)

    # fc_out:  concat_h(ctx_h) @ Wfc  ==  sum_h ctx_h @ Wfc[h*D:(h+1)*D, :]
    # Accumulated directly into a full-E-lane f32 slab (no concat of D-wide slices).
    wfc = wfc_ref[...]                        # (E, E) bf16
    attn_out = jnp.zeros((Bt * S, E), f32)
    for h in range(heads):                    # static & small; leading-dim slices only
        attn_out = attn_out + jnp.dot(ctx[:, h].reshape(Bt * S, D),
                                      wfc[h * D:(h + 1) * D, :],
                                      preferred_element_type=f32)
    attn_out = attn_out + bfc_ref[...]

    # ---------------- residual + LayerNorm 1 (dropout = identity) ----------------
    x2d = x_ref[...].reshape(Bt * S, E)       # f32 residual path
    h1 = attn_out + x2d
    mu1 = jnp.sum(h1, axis=-1, keepdims=True) * inv_e
    var1 = jnp.maximum(jnp.sum(h1 * h1, axis=-1, keepdims=True) * inv_e - mu1 * mu1, 0.0)
    x1 = (h1 - mu1) * jax.lax.rsqrt(var1 + 1e-5) * g1_ref[...] + be1_ref[...]

    # ---------------- feed-forward: Linear -> ReLU -> Linear ----------------
    ff = jnp.dot(x1.astype(jnp.bfloat16), w1_ref[...],
                 preferred_element_type=f32) + b1_ref[...]
    ff = jnp.maximum(ff, 0.0)
    ff = jnp.dot(ff.astype(jnp.bfloat16), w2_ref[...],
                 preferred_element_type=f32) + b2_ref[...]

    # ---------------- residual + LayerNorm 2 (dropout = identity) ----------------
    h2 = ff + x1
    mu2 = jnp.sum(h2, axis=-1, keepdims=True) * inv_e
    var2 = jnp.maximum(jnp.sum(h2 * h2, axis=-1, keepdims=True) * inv_e - mu2 * mu2, 0.0)
    out = (h2 - mu2) * jax.lax.rsqrt(var2 + 1e-5) * g2_ref[...] + be2_ref[...]

    out_ref[...] = out.reshape(Bt, S, E)


def _pick_batch_tile(N, S, max_rows=256):
    """Batch rows folded per grid step.

    Keep Bt*S flattened rows <= max_rows per step (amortizes ~0.35us/step grid
    overhead, keeps stores dense), and keep >=2 grid steps for v7x megacore
    when that does not shrink the fold below ~64 rows.
    """
    bt = max(1, min(N, max_rows // max(S, 1)))
    while N % bt:
        bt -= 1
    if N // bt < 2 and N >= 2 and (N // 2) * S >= 64:
        bt = max(1, N // 2)
        while bt > 1 and N % bt:
            bt -= 1
    return bt


def transformer_block(x, mask_bias_g, params, *, heads, batch_tile=None):
    """x: (N, S, E) f32, mask_bias_g: (N*heads, 1, S) f32 additive bias."""
    N, S, E = x.shape
    D = E // heads
    Bt = batch_tile if batch_tile is not None else _pick_batch_tile(N, S)
    assert N % Bt == 0

    # Head-major bf16 view of x for the attention MXU operands; the transpose
    # (layout plumbing) runs in XLA outside the kernel.
    xh = (x.reshape(N, S, heads, D)
            .transpose(0, 2, 1, 3)
            .reshape(N * heads, S, D)
            .astype(jnp.bfloat16))

    weight_order = ["wfc", "bfc", "g1", "be1", "w1", "b1", "w2", "b2", "g2", "be2"]
    weights = [params[k] for k in weight_order]

    def full_spec(arr):
        # Constant block index across the grid -> weights stay resident.
        nd = arr.ndim
        return pl.BlockSpec(arr.shape, lambda n, _nd=nd: (0,) * _nd)

    kern = functools.partial(transformer_block_kernel, heads=heads)

    return pl.pallas_call(
        kern,
        out_shape=jax.ShapeDtypeStruct((N, S, E), jnp.float32),
        grid_spec=pltpu.PrefetchScalarGridSpec(
            num_scalar_prefetch=0,
            grid=(N // Bt,),
            in_specs=[pl.BlockSpec((Bt, S, E), lambda n: (n, 0, 0)),
                      pl.BlockSpec((Bt * heads, S, D), lambda n: (n, 0, 0)),
                      pl.BlockSpec((Bt * heads, 1, S), lambda n: (n, 0, 0))]
                     + [full_spec(w) for w in weights],
            out_specs=pl.BlockSpec((Bt, S, E), lambda n: (n, 0, 0)),
        ),
        compiler_params=pltpu.CompilerParams(
            dimension_semantics=("parallel",),
            vmem_limit_bytes=48 * 1024 * 1024,
        ),
    )(x, xh, mask_bias_g, *weights)


def init_layer_params(key, embed_size, forward_expansion):
    ks = jax.random.split(key, 10)
    E = embed_size
    H = forward_expansion * embed_size
    bf16 = jnp.bfloat16
    return {
        # MXU weight matrices stored bf16 (halves resident VMEM; f32 accumulate).
        "wfc": (jax.random.normal(ks[0], (E, E), jnp.float32) * 0.1).astype(bf16),
        "bfc": jax.random.normal(ks[1], (1, E), jnp.float32) * 0.1,
        "g1":  jnp.ones((1, E), jnp.float32)
               + jax.random.normal(ks[2], (1, E), jnp.float32) * 0.05,
        "be1": jax.random.normal(ks[3], (1, E), jnp.float32) * 0.05,
        "w1":  (jax.random.normal(ks[4], (E, H), jnp.float32) * 0.1).astype(bf16),
        "b1":  jax.random.normal(ks[5], (1, H), jnp.float32) * 0.1,
        "w2":  (jax.random.normal(ks[6], (H, E), jnp.float32) * 0.1).astype(bf16),
        "b2":  jax.random.normal(ks[7], (1, E), jnp.float32) * 0.1,
        "g2":  jnp.ones((1, E), jnp.float32)
               + jax.random.normal(ks[8], (1, E), jnp.float32) * 0.05,
        "be2": jax.random.normal(ks[9], (1, E), jnp.float32) * 0.05,
    }


def encoder_forward(tokens, mask, word_emb, pos_emb, layer_params, *, heads):
    N, S = tokens.shape
    # TODO(synk): embedding gathers + cross-layer weight prefetch stay in plain
    # JAX glue (data-dependent row gather / cross-call futures not worth a
    # Pallas kernel at this size); dropout = identity (eval mode).
    positions = jnp.broadcast_to(jnp.arange(S, dtype=jnp.int32), (N, S))
    out = jnp.take(word_emb, tokens, axis=0) + jnp.take(pos_emb, positions, axis=0)

    # Hoisted additive attention-mask bias, precomputed once and pre-expanded
    # over heads: (N*heads, 1, S) with 0 on visible keys and -1e20 on masked keys.
    bias = jnp.where(mask == 0, jnp.float32(-1e20), jnp.float32(0.0))   # (N, 1, S)
    bias_g = jnp.broadcast_to(bias[:, None], (N, heads, 1, S)).reshape(N * heads, 1, S)

    for params in layer_params:
        out = transformer_block(out, bias_g, params, heads=heads)
    return out


if __name__ == "__main__":
    # Small, module-consistent shapes.
    src_vocab_size = 50
    embed_size = 32
    num_layers = 2
    heads = 4
    forward_expansion = 4
    max_length = 16
    N, S = 2, 8

    key = jax.random.PRNGKey(0)
    k_tok, k_we, k_pe, *k_layers = jax.random.split(key, 3 + num_layers)

    tokens = jax.random.randint(k_tok, (N, S), 0, src_vocab_size, dtype=jnp.int32)

    # Padding mask (N, 1, S); broadcast over heads & query rows inside the
    # kernel (mirrors a (N,1,1,S) torch mask). Last two keys of batch 1 masked.
    mask = jnp.ones((N, 1, S), jnp.float32)
    mask = mask.at[1, 0, S - 2:].set(0.0)

    word_emb = jax.random.normal(k_we, (src_vocab_size, embed_size), jnp.float32) * 0.1
    pos_emb = jax.random.normal(k_pe, (max_length, embed_size), jnp.float32) * 0.1

    layer_params = [init_layer_params(k_layers[i], embed_size, forward_expansion)
                    for i in range(num_layers)]

    out = encoder_forward(tokens, mask, word_emb, pos_emb, layer_params, heads=heads)
    out = jax.block_until_ready(out)
    assert out.shape == (N, S, embed_size)
    assert bool(jnp.all(jnp.isfinite(out)))
    print("KERNEL_OK")
</pallas_src>

<mosaic_0001>
module attributes {stable_mosaic.version = 11 : i64} {
  func.func @transformer_block_kernel(%arg0: i32, %arg1: memref<2x8x32xf32, #tpu.memory_space<vmem>>, %arg2: memref<8x8x8xbf16, #tpu.memory_space<vmem>>, %arg3: memref<8x1x8xf32, #tpu.memory_space<vmem>>, %arg4: memref<32x32xbf16, #tpu.memory_space<vmem>>, %arg5: memref<1x32xf32, #tpu.memory_space<vmem>>, %arg6: memref<1x32xf32, #tpu.memory_space<vmem>>, %arg7: memref<1x32xf32, #tpu.memory_space<vmem>>, %arg8: memref<32x128xbf16, #tpu.memory_space<vmem>>, %arg9: memref<1x128xf32, #tpu.memory_space<vmem>>, %arg10: memref<128x32xbf16, #tpu.memory_space<vmem>>, %arg11: memref<1x32xf32, #tpu.memory_space<vmem>>, %arg12: memref<1x32xf32, #tpu.memory_space<vmem>>, %arg13: memref<1x32xf32, #tpu.memory_space<vmem>>, %arg14: memref<2x8x32xf32, #tpu.memory_space<vmem>>) attributes {dimension_semantics = [#tpu.dimension_semantics<parallel>], iteration_bounds = array<i64: 1>, scalar_prefetch = 0 : i64, scratch_operands = 0 : i64, tpu.core_type = #tpu.core_type<tc>, window_params = [{transform_indices = @transform_0, window_bounds = array<i64: 2, 8, 32>}, {transform_indices = @transform_1, window_bounds = array<i64: 8, 8, 8>}, {transform_indices = @transform_2, window_bounds = array<i64: 8, 1, 8>}, {pipeline_mode = #tpu.pipeline_mode<synchronous>, transform_indices = @transform_3, window_bounds = array<i64: 32, 32>}, {pipeline_mode = #tpu.pipeline_mode<synchronous>, transform_indices = @transform_4, window_bounds = array<i64: 1, 32>}, {pipeline_mode = #tpu.pipeline_mode<synchronous>, transform_indices = @transform_5, window_bounds = array<i64: 1, 32>}, {pipeline_mode = #tpu.pipeline_mode<synchronous>, transform_indices = @transform_6, window_bounds = array<i64: 1, 32>}, {pipeline_mode = #tpu.pipeline_mode<synchronous>, transform_indices = @transform_7, window_bounds = array<i64: 32, 128>}, {pipeline_mode = #tpu.pipeline_mode<synchronous>, transform_indices = @transform_8, window_bounds = array<i64: 1, 128>}, {pipeline_mode = #tpu.pipeline_mode<synchronous>, transform_indices = @transform_9, window_bounds = array<i64: 128, 32>}, {pipeline_mode = #tpu.pipeline_mode<synchronous>, transform_indices = @transform_10, window_bounds = array<i64: 1, 32>}, {pipeline_mode = #tpu.pipeline_mode<synchronous>, transform_indices = @transform_11, window_bounds = array<i64: 1, 32>}, {pipeline_mode = #tpu.pipeline_mode<synchronous>, transform_indices = @transform_12, window_bounds = array<i64: 1, 32>}, {transform_indices = @transform_13, window_bounds = array<i64: 2, 8, 32>}]} {
    %c0 = arith.constant 0 : index
    %c0_0 = arith.constant 0 : index
    %c0_1 = arith.constant 0 : index
    %0 = vector.load %arg2[%c0, %c0_0, %c0_1] : memref<8x8x8xbf16, #tpu.memory_space<vmem>>, vector<8x8x8xbf16>
    %cst = arith.constant 1.767580e-01 : bf16
    %1 = vector.broadcast %cst : bf16 to vector<8x8x8xbf16>
    %2 = arith.mulf %0, %1 : vector<8x8x8xbf16>
    "tpu.trace_start"() <{level = 10 : i32, message = "gqd,gkd->gqk"}> : () -> ()
    %cst_2 = arith.constant dense<0.000000e+00> : vector<8x8x8xf32>
    %3 = tpu.matmul %2, %0, %cst_2 {dimension_numbers = #tpu.dot_dimension_numbers<[2], [2], [1], [1], [0, 0, 0, 1, 1, 1], [0], [0]>} : vector<8x8x8xbf16>, vector<8x8x8xbf16>, vector<8x8x8xf32> -> vector<8x8x8xf32>
    "tpu.trace_stop"() : () -> ()
    %c0_3 = arith.constant 0 : index
    %c0_4 = arith.constant 0 : index
    %c0_5 = arith.constant 0 : index
    %4 = vector.load %arg3[%c0_3, %c0_4, %c0_5] : memref<8x1x8xf32, #tpu.memory_space<vmem>>, vector<8x1x8xf32>
    %5 = vector.broadcast %4 : vector<8x1x8xf32> to vector<8x8x8xf32>
    %6 = arith.addf %3, %5 : vector<8x8x8xf32>
    %cst_6 = arith.constant dense<0xFF800000> : vector<8x8xf32>
    %7 = vector.multi_reduction <maximumf>, %6, %cst_6 [2] : vector<8x8x8xf32> to vector<8x8xf32>
    %8 = vector.shape_cast %7 : vector<8x8xf32> to vector<8x8x1xf32>
    %9 = vector.broadcast %8 : vector<8x8x1xf32> to vector<8x8x8xf32>
    %10 = arith.subf %6, %9 : vector<8x8x8xf32>
    %11 = math.exp %10 : vector<8x8x8xf32>
    %cst_7 = arith.constant dense<0.000000e+00> : vector<8x8xf32>
    %12 = vector.multi_reduction <add>, %11, %cst_7 [2] : vector<8x8x8xf32> to vector<8x8xf32>
    %13 = vector.shape_cast %12 : vector<8x8xf32> to vector<8x8x1xf32>
    %14 = tpu.reciprocal %13 {approx = true} : vector<8x8x1xf32> -> vector<8x8x1xf32>
    %15 = vector.broadcast %14 : vector<8x8x1xf32> to vector<8x8x8xf32>
    %16 = arith.mulf %11, %15 : vector<8x8x8xf32>
    %17 = arith.truncf %16 : vector<8x8x8xf32> to vector<8x8x8xbf16>
    "tpu.trace_start"() <{level = 10 : i32, message = "gqk,gkd->gqd"}> : () -> ()
    %cst_8 = arith.constant dense<0.000000e+00> : vector<8x8x8xf32>
    %18 = tpu.matmul %17, %0, %cst_8 {dimension_numbers = #tpu.dot_dimension_numbers<[2], [1], [1], [2], [0, 0, 0, 1, 1, 2], [0], [0]>} : vector<8x8x8xbf16>, vector<8x8x8xbf16>, vector<8x8x8xf32> -> vector<8x8x8xf32>
    "tpu.trace_stop"() : () -> ()
    %19 = vector.shape_cast %18 : vector<8x8x8xf32> to vector<2x4x8x8xf32>
    %20 = arith.truncf %19 : vector<2x4x8x8xf32> to vector<2x4x8x8xbf16>
    %c0_9 = arith.constant 0 : index
    %c0_10 = arith.constant 0 : index
    %21 = vector.load %arg4[%c0_9, %c0_10] : memref<32x32xbf16, #tpu.memory_space<vmem>>, vector<32x32xbf16>
    %cst_11 = arith.constant 0.000000e+00 : f32
    %22 = vector.broadcast %cst_11 : f32 to vector<16x32xf32>
    %23 = vector.extract_strided_slice %20 {offsets = [0, 0, 0, 0], sizes = [2, 1, 8, 8], strides = [1, 1, 1, 1]} : vector<2x4x8x8xbf16> to vector<2x1x8x8xbf16>
    %24 = vector.shape_cast %23 : vector<2x1x8x8xbf16> to vector<2x8x8xbf16>
    %25 = vector.shape_cast %24 : vector<2x8x8xbf16> to vector<16x8xbf16>
    %26 = vector.extract_strided_slice %21 {offsets = [0, 0], sizes = [8, 32], strides = [1, 1]} : vector<32x32xbf16> to vector<8x32xbf16>
    %cst_12 = arith.constant dense<0.000000e+00> : vector<16x32xf32>
    %27 = tpu.matmul %25, %26, %cst_12 {dimension_numbers = #tpu.dot_dimension_numbers<[1], [0], [0], [1], [0, 0, 1, 1], [], []>} : vector<16x8xbf16>, vector<8x32xbf16>, vector<16x32xf32> -> vector<16x32xf32>
    %28 = arith.addf %22, %27 : vector<16x32xf32>
    %29 = vector.extract_strided_slice %20 {offsets = [0, 1, 0, 0], sizes = [2, 1, 8, 8], strides = [1, 1, 1, 1]} : vector<2x4x8x8xbf16> to vector<2x1x8x8xbf16>
    %30 = vector.shape_cast %29 : vector<2x1x8x8xbf16> to vector<2x8x8xbf16>
    %31 = vector.shape_cast %30 : vector<2x8x8xbf16> to vector<16x8xbf16>
    %32 = vector.extract_strided_slice %21 {offsets = [8, 0], sizes = [8, 32], strides = [1, 1]} : vector<32x32xbf16> to vector<8x32xbf16>
    %cst_13 = arith.constant dense<0.000000e+00> : vector<16x32xf32>
    %33 = tpu.matmul %31, %32, %cst_13 {dimension_numbers = #tpu.dot_dimension_numbers<[1], [0], [0], [1], [0, 0, 1, 1], [], []>} : vector<16x8xbf16>, vector<8x32xbf16>, vector<16x32xf32> -> vector<16x32xf32>
    %34 = arith.addf %28, %33 : vector<16x32xf32>
    %35 = vector.extract_strided_slice %20 {offsets = [0, 2, 0, 0], sizes = [2, 1, 8, 8], strides = [1, 1, 1, 1]} : vector<2x4x8x8xbf16> to vector<2x1x8x8xbf16>
    %36 = vector.shape_cast %35 : vector<2x1x8x8xbf16> to vector<2x8x8xbf16>
    %37 = vector.shape_cast %36 : vector<2x8x8xbf16> to vector<16x8xbf16>
    %38 = vector.extract_strided_slice %21 {offsets = [16, 0], sizes = [8, 32], strides = [1, 1]} : vector<32x32xbf16> to vector<8x32xbf16>
    %cst_14 = arith.constant dense<0.000000e+00> : vector<16x32xf32>
    %39 = tpu.matmul %37, %38, %cst_14 {dimension_numbers = #tpu.dot_dimension_numbers<[1], [0], [0], [1], [0, 0, 1, 1], [], []>} : vector<16x8xbf16>, vector<8x32xbf16>, vector<16x32xf32> -> vector<16x32xf32>
    %40 = arith.addf %34, %39 : vector<16x32xf32>
    %41 = vector.extract_strided_slice %20 {offsets = [0, 3, 0, 0], sizes = [2, 1, 8, 8], strides = [1, 1, 1, 1]} : vector<2x4x8x8xbf16> to vector<2x1x8x8xbf16>
    %42 = vector.shape_cast %41 : vector<2x1x8x8xbf16> to vector<2x8x8xbf16>
    %43 = vector.shape_cast %42 : vector<2x8x8xbf16> to vector<16x8xbf16>
    %44 = vector.extract_strided_slice %21 {offsets = [24, 0], sizes = [8, 32], strides = [1, 1]} : vector<32x32xbf16> to vector<8x32xbf16>
    %cst_15 = arith.constant dense<0.000000e+00> : vector<16x32xf32>
    %45 = tpu.matmul %43, %44, %cst_15 {dimension_numbers = #tpu.dot_dimension_numbers<[1], [0], [0], [1], [0, 0, 1, 1], [], []>} : vector<16x8xbf16>, vector<8x32xbf16>, vector<16x32xf32> -> vector<16x32xf32>
    %46 = arith.addf %40, %45 : vector<16x32xf32>
    %c0_16 = arith.constant 0 : index
    %c0_17 = arith.constant 0 : index
    %47 = vector.load %arg5[%c0_16, %c0_17] : memref<1x32xf32, #tpu.memory_space<vmem>>, vector<1x32xf32>
    %48 = vector.broadcast %47 : vector<1x32xf32> to vector<16x32xf32>
    %49 = arith.addf %46, %48 : vector<16x32xf32>
    %c0_18 = arith.constant 0 : index
    %c0_19 = arith.constant 0 : index
    %c0_20 = arith.constant 0 : index
    %50 = vector.load %arg1[%c0_18, %c0_19, %c0_20] : memref<2x8x32xf32, #tpu.memory_space<vmem>>, vector<2x8x32xf32>
    %51 = vector.shape_cast %50 : vector<2x8x32xf32> to vector<16x32xf32>
    %52 = arith.addf %49, %51 : vector<16x32xf32>
    %cst_21 = arith.constant dense<0.000000e+00> : vector<16xf32>
    %53 = vector.multi_reduction <add>, %52, %cst_21 [1] : vector<16x32xf32> to vector<16xf32>
    %54 = vector.shape_cast %53 : vector<16xf32> to vector<16x1xf32>
    %cst_22 = arith.constant 3.125000e-02 : f32
    %55 = vector.broadcast %cst_22 : f32 to vector<16x1xf32>
    %56 = arith.mulf %54, %55 : vector<16x1xf32>
    %57 = arith.mulf %52, %52 : vector<16x32xf32>
    %cst_23 = arith.constant dense<0.000000e+00> : vector<16xf32>
    %58 = vector.multi_reduction <add>, %57, %cst_23 [1] : vector<16x32xf32> to vector<16xf32>
    %59 = vector.shape_cast %58 : vector<16xf32> to vector<16x1xf32>
    %cst_24 = arith.constant 3.125000e-02 : f32
    %60 = vector.broadcast %cst_24 : f32 to vector<16x1xf32>
    %61 = arith.mulf %59, %60 : vector<16x1xf32>
    %62 = arith.mulf %56, %56 : vector<16x1xf32>
    %63 = arith.subf %61, %62 : vector<16x1xf32>
    %cst_25 = arith.constant 0.000000e+00 : f32
    %64 = vector.broadcast %cst_25 : f32 to vector<16x1xf32>
    %65 = arith.maximumf %63, %64 : vector<16x1xf32>
    %66 = vector.broadcast %56 : vector<16x1xf32> to vector<16x32xf32>
    %67 = arith.subf %52, %66 : vector<16x32xf32>
    %cst_26 = arith.constant 9.99999974E-6 : f32
    %68 = vector.broadcast %cst_26 : f32 to vector<16x1xf32>
    %69 = arith.addf %65, %68 : vector<16x1xf32>
    %70 = math.rsqrt %69 : vector<16x1xf32>
    %71 = vector.broadcast %70 : vector<16x1xf32> to vector<16x32xf32>
    %72 = arith.mulf %67, %71 : vector<16x32xf32>
    %c0_27 = arith.constant 0 : index
    %c0_28 = arith.constant 0 : index
    %73 = vector.load %arg6[%c0_27, %c0_28] : memref<1x32xf32, #tpu.memory_space<vmem>>, vector<1x32xf32>
    %74 = vector.broadcast %73 : vector<1x32xf32> to vector<16x32xf32>
    %75 = arith.mulf %72, %74 : vector<16x32xf32>
    %c0_29 = arith.constant 0 : index
    %c0_30 = arith.constant 0 : index
    %76 = vector.load %arg7[%c0_29, %c0_30] : memref<1x32xf32, #tpu.memory_space<vmem>>, vector<1x32xf32>
    %77 = vector.broadcast %76 : vector<1x32xf32> to vector<16x32xf32>
    %78 = arith.addf %75, %77 : vector<16x32xf32>
    %79 = arith.truncf %78 : vector<16x32xf32> to vector<16x32xbf16>
    %c0_31 = arith.constant 0 : index
    %c0_32 = arith.constant 0 : index
    %80 = vector.load %arg8[%c0_31, %c0_32] : memref<32x128xbf16, #tpu.memory_space<vmem>>, vector<32x128xbf16>
    %cst_33 = arith.constant dense<0.000000e+00> : vector<16x128xf32>
    %81 = tpu.matmul %79, %80, %cst_33 {dimension_numbers = #tpu.dot_dimension_numbers<[1], [0], [0], [1], [0, 0, 1, 1], [], []>} : vector<16x32xbf16>, vector<32x128xbf16>, vector<16x128xf32> -> vector<16x128xf32>
    %c0_34 = arith.constant 0 : index
    %c0_35 = arith.constant 0 : index
    %82 = vector.load %arg9[%c0_34, %c0_35] : memref<1x128xf32, #tpu.memory_space<vmem>>, vector<1x128xf32>
    %83 = vector.broadcast %82 : vector<1x128xf32> to vector<16x128xf32>
    %84 = arith.addf %81, %83 : vector<16x128xf32>
    %cst_36 = arith.constant 0.000000e+00 : f32
    %85 = vector.broadcast %cst_36 : f32 to vector<16x128xf32>
    %86 = arith.maximumf %84, %85 : vector<16x128xf32>
    %87 = arith.truncf %86 : vector<16x128xf32> to vector<16x128xbf16>
    %c0_37 = arith.constant 0 : index
    %c0_38 = arith.constant 0 : index
    %88 = vector.load %arg10[%c0_37, %c0_38] : memref<128x32xbf16, #tpu.memory_space<vmem>>, vector<128x32xbf16>
    %cst_39 = arith.constant dense<0.000000e+00> : vector<16x32xf32>
    %89 = tpu.matmul %87, %88, %cst_39 {dimension_numbers = #tpu.dot_dimension_numbers<[1], [0], [0], [1], [0, 0, 1, 1], [], []>} : vector<16x128xbf16>, vector<128x32xbf16>, vector<16x32xf32> -> vector<16x32xf32>
    %c0_40 = arith.constant 0 : index
    %c0_41 = arith.constant 0 : index
    %90 = vector.load %arg11[%c0_40, %c0_41] : memref<1x32xf32, #tpu.memory_space<vmem>>, vector<1x32xf32>
    %91 = vector.broadcast %90 : vector<1x32xf32> to vector<16x32xf32>
    %92 = arith.addf %89, %91 : vector<16x32xf32>
    %93 = arith.addf %92, %78 : vector<16x32xf32>
    %cst_42 = arith.constant dense<0.000000e+00> : vector<16xf32>
    %94 = vector.multi_reduction <add>, %93, %cst_42 [1] : vector<16x32xf32> to vector<16xf32>
    %95 = vector.shape_cast %94 : vector<16xf32> to vector<16x1xf32>
    %cst_43 = arith.constant 3.125000e-02 : f32
    %96 = vector.broadcast %cst_43 : f32 to vector<16x1xf32>
    %97 = arith.mulf %95, %96 : vector<16x1xf32>
    %98 = arith.mulf %93, %93 : vector<16x32xf32>
    %cst_44 = arith.constant dense<0.000000e+00> : vector<16xf32>
    %99 = vector.multi_reduction <add>, %98, %cst_44 [1] : vector<16x32xf32> to vector<16xf32>
    %100 = vector.shape_cast %99 : vector<16xf32> to vector<16x1xf32>
    %cst_45 = arith.constant 3.125000e-02 : f32
    %101 = vector.broadcast %cst_45 : f32 to vector<16x1xf32>
    %102 = arith.mulf %100, %101 : vector<16x1xf32>
    %103 = arith.mulf %97, %97 : vector<16x1xf32>
    %104 = arith.subf %102, %103 : vector<16x1xf32>
    %cst_46 = arith.constant 0.000000e+00 : f32
    %105 = vector.broadcast %cst_46 : f32 to vector<16x1xf32>
    %106 = arith.maximumf %104, %105 : vector<16x1xf32>
    %107 = vector.broadcast %97 : vector<16x1xf32> to vector<16x32xf32>
    %108 = arith.subf %93, %107 : vector<16x32xf32>
    %cst_47 = arith.constant 9.99999974E-6 : f32
    %109 = vector.broadcast %cst_47 : f32 to vector<16x1xf32>
    %110 = arith.addf %106, %109 : vector<16x1xf32>
    %111 = math.rsqrt %110 : vector<16x1xf32>
    %112 = vector.broadcast %111 : vector<16x1xf32> to vector<16x32xf32>
    %113 = arith.mulf %108, %112 : vector<16x32xf32>
    %c0_48 = arith.constant 0 : index
    %c0_49 = arith.constant 0 : index
    %114 = vector.load %arg12[%c0_48, %c0_49] : memref<1x32xf32, #tpu.memory_space<vmem>>, vector<1x32xf32>
    %115 = vector.broadcast %114 : vector<1x32xf32> to vector<16x32xf32>
    %116 = arith.mulf %113, %115 : vector<16x32xf32>
    %c0_50 = arith.constant 0 : index
    %c0_51 = arith.constant 0 : index
    %117 = vector.load %arg13[%c0_50, %c0_51] : memref<1x32xf32, #tpu.memory_space<vmem>>, vector<1x32xf32>
    %118 = vector.broadcast %117 : vector<1x32xf32> to vector<16x32xf32>
    %119 = arith.addf %116, %118 : vector<16x32xf32>
    %120 = vector.shape_cast %119 : vector<16x32xf32> to vector<2x8x32xf32>
    %c0_52 = arith.constant 0 : index
    %c0_53 = arith.constant 0 : index
    %c0_54 = arith.constant 0 : index
    %121 = vector.load %arg14[%c0_52, %c0_53, %c0_54] : memref<2x8x32xf32, #tpu.memory_space<vmem>>, vector<2x8x32xf32>
    tpu.vector_store %arg14[%c0_52, %c0_53, %c0_54], %120 {strides = array<i32>} : memref<2x8x32xf32, #tpu.memory_space<vmem>>, vector<2x8x32xf32>,
    return
  }
  func.func @transform_0(%arg0: i32) -> (i32, i32, i32) {
    %c0_i32 = arith.constant 0 : i32
    %c0_i32_0 = arith.constant 0 : i32
    %c0_i32_1 = arith.constant 0 : i32
    return %arg0, %c0_i32, %c0_i32_0 : i32, i32, i32
  }
  func.func @transform_1(%arg0: i32) -> (i32, i32, i32) {
    %c0_i32 = arith.constant 0 : i32
    %c0_i32_0 = arith.constant 0 : i32
    %c0_i32_1 = arith.constant 0 : i32
    return %arg0, %c0_i32, %c0_i32_0 : i32, i32, i32
  }
  func.func @transform_2(%arg0: i32) -> (i32, i32, i32) {
    %c0_i32 = arith.constant 0 : i32
    %c0_i32_0 = arith.constant 0 : i32
    %c0_i32_1 = arith.constant 0 : i32
    return %arg0, %c0_i32, %c0_i32_0 : i32, i32, i32
  }
  func.func @transform_3(%arg0: i32) -> (i32, i32) {
    %c0_i32 = arith.constant 0 : i32
    %c0_i32_0 = arith.constant 0 : i32
    %c0_i32_1 = arith.constant 0 : i32
    return %c0_i32, %c0_i32_0 : i32, i32
  }
  func.func @transform_4(%arg0: i32) -> (i32, i32) {
    %c0_i32 = arith.constant 0 : i32
    %c0_i32_0 = arith.constant 0 : i32
    %c0_i32_1 = arith.constant 0 : i32
    return %c0_i32, %c0_i32_0 : i32, i32
  }
  func.func @transform_5(%arg0: i32) -> (i32, i32) {
    %c0_i32 = arith.constant 0 : i32
    %c0_i32_0 = arith.constant 0 : i32
    %c0_i32_1 = arith.constant 0 : i32
    return %c0_i32, %c0_i32_0 : i32, i32
  }
  func.func @transform_6(%arg0: i32) -> (i32, i32) {
    %c0_i32 = arith.constant 0 : i32
    %c0_i32_0 = arith.constant 0 : i32
    %c0_i32_1 = arith.constant 0 : i32
    return %c0_i32, %c0_i32_0 : i32, i32
  }
  func.func @transform_7(%arg0: i32) -> (i32, i32) {
    %c0_i32 = arith.constant 0 : i32
    %c0_i32_0 = arith.constant 0 : i32
    %c0_i32_1 = arith.constant 0 : i32
    return %c0_i32, %c0_i32_0 : i32, i32
  }
  func.func @transform_8(%arg0: i32) -> (i32, i32) {
    %c0_i32 = arith.constant 0 : i32
    %c0_i32_0 = arith.constant 0 : i32
    %c0_i32_1 = arith.constant 0 : i32
    return %c0_i32, %c0_i32_0 : i32, i32
  }
  func.func @transform_9(%arg0: i32) -> (i32, i32) {
    %c0_i32 = arith.constant 0 : i32
    %c0_i32_0 = arith.constant 0 : i32
    %c0_i32_1 = arith.constant 0 : i32
    return %c0_i32, %c0_i32_0 : i32, i32
  }
  func.func @transform_10(%arg0: i32) -> (i32, i32) {
    %c0_i32 = arith.constant 0 : i32
    %c0_i32_0 = arith.constant 0 : i32
    %c0_i32_1 = arith.constant 0 : i32
    return %c0_i32, %c0_i32_0 : i32, i32
  }
  func.func @transform_11(%arg0: i32) -> (i32, i32) {
    %c0_i32 = arith.constant 0 : i32
    %c0_i32_0 = arith.constant 0 : i32
    %c0_i32_1 = arith.constant 0 : i32
    return %c0_i32, %c0_i32_0 : i32, i32
  }
  func.func @transform_12(%arg0: i32) -> (i32, i32) {
    %c0_i32 = arith.constant 0 : i32
    %c0_i32_0 = arith.constant 0 : i32
    %c0_i32_1 = arith.constant 0 : i32
    return %c0_i32, %c0_i32_0 : i32, i32
  }
  func.func @transform_13(%arg0: i32) -> (i32, i32, i32) {
    %c0_i32 = arith.constant 0 : i32
    %c0_i32_0 = arith.constant 0 : i32
    %c0_i32_1 = arith.constant 0 : i32
    return %arg0, %c0_i32, %c0_i32_0 : i32, i32, i32
  }
}

</mosaic_0001>

<llo_original>
// kernel: tpu_custom_call.1
$region0: #{tpu_custom_call.1}
  #allocation0 [shape = 'u32[]', space=smem, size = 0x4, offset = 0x4, fixed_abs, tag = 'smem constant byte address 0x4 - core index']
  #allocation1 [shape = 'u32[144,128]{1,0:T(1,128)}', space=vmem, size = 0x12000, scoped, tag = 'internal scratch']
  %s0 = inlined_call_operand.vmem [shape: f32[2,8,32], index: 0, kind: input, shape index: {}]
  %s1 = inlined_call_operand.vmem [shape: bf16[8,8,8], index: 1, kind: input, shape index: {}]
  %s2 = inlined_call_operand.hbm [shape: f32[8,1,8], index: 2, kind: input, shape index: {}]
  %s3 = inlined_call_operand.vmem [shape: bf16[32,32], index: 3, kind: input, shape index: {}]
  %s4 = inlined_call_operand.vmem [shape: f32[1,32], index: 4, kind: input, shape index: {}]
  %s5 = inlined_call_operand.vmem [shape: f32[1,32], index: 5, kind: input, shape index: {}]
  %s6 = inlined_call_operand.vmem [shape: f32[1,32], index: 6, kind: input, shape index: {}]
  %s7 = inlined_call_operand.vmem [shape: bf16[32,128], index: 7, kind: input, shape index: {}]
  %s8 = inlined_call_operand.vmem [shape: f32[1,128], index: 8, kind: input, shape index: {}]
  %s9 = inlined_call_operand.vmem [shape: bf16[128,32], index: 9, kind: input, shape index: {}]
  %s10 = inlined_call_operand.vmem [shape: f32[1,32], index: 10, kind: input, shape index: {}]
  %s11 = inlined_call_operand.vmem [shape: f32[1,32], index: 11, kind: input, shape index: {}]
  %s12 = inlined_call_operand.vmem [shape: f32[1,32], index: 12, kind: input, shape index: {}]
  %s13 = inlined_call_operand.hbm [shape: f32[2,8,32], index: 13, kind: output, shape index: {}]
  %s14 = sld [smem:[#allocation0]]
  $region66: #{tpu_custom_call.1} parent=0
    _
  %s16 = ssub.s32 1, %s14
  %s17 = scalar_select 0, %s16, %s14
  $region1: #{tpu_custom_call.1} parent=0
    #allocation2 [shape = 'u8[4096]{0}', space=vmem, size = 0x1000, scoped, tag = 'input window, operand 2, single buffered']
    #allocation3 [shape = 's32[1]{0}', space=sflag, size = 0x4, scoped, tag = 'scoped memory for tpu_custom_call.1']
    #allocation4 [shape = 's32[1]{0}', space=sflag, size = 0x4, scoped, tag = 'scoped memory for tpu_custom_call.1']
    #allocation5 [shape = 'u8[8192]{0}', space=vmem, size = 0x2000, scoped, tag = 'output window, operand 0, single buffered']
    %18 = vsyncpa [#allocation3], 0
    %19 = vsyncpa [#allocation4], 0
    // Predicated region
    $region2: #{tpu_custom_call.1} parent=1 // pred_check
      _
    $region3: #{tpu_custom_call.1} parent=1 // pred_check_branch
      %21 = sbr.rel (0) target = $region5
    $region4: #{tpu_custom_call.1} parent=1 // pred_region
      _
    $region5: #{tpu_custom_call.1} parent=1 // pred_fallthru
      _
    // Predicated region
    $region6: #{tpu_custom_call.1} parent=1 // pred_check
      _
    $region7: #{tpu_custom_call.1} parent=1 // pred_check_branch
      %23 = sbr.rel (0) target = $region9
    $region8: #{tpu_custom_call.1} parent=1 // pred_region
      _
    $region9: #{tpu_custom_call.1} parent=1 // pred_fallthru
      _
    // Predicated region
    $region10: #{tpu_custom_call.1} parent=1 // pred_check
      _
    $region11: #{tpu_custom_call.1} parent=1 // pred_check_branch
      %25 = sbr.rel (0) target = $region13
    $region12: #{tpu_custom_call.1} parent=1 // pred_region
      %s27 = ssub.s32 128, 128
      %28 = vsyncadd [#allocation3], %s27
      %s29 = sshll.u32 [#allocation2], 4
      %s30 = int_to_ptr.vmem [resolvable:$true] %s29
      %35 = dma.hbm_to_vmem [thread:$0]  %s2, 128, %s30, [#allocation3], 16, 16, 1
    $region13: #{tpu_custom_call.1} parent=1 // pred_fallthru
      _
    // Predicated region
    $region14: #{tpu_custom_call.1} parent=1 // pred_check
      _
    $region15: #{tpu_custom_call.1} parent=1 // pred_check_branch
      %37 = sbr.rel (0) target = $region17
    $region16: #{tpu_custom_call.1} parent=1 // pred_region
      _
    $region17: #{tpu_custom_call.1} parent=1 // pred_fallthru
      _
    // Predicated region
    $region18: #{tpu_custom_call.1} parent=1 // pred_check
      _
    $region19: #{tpu_custom_call.1} parent=1 // pred_check_branch
      %39 = sbr.rel (0) target = $region21
    $region20: #{tpu_custom_call.1} parent=1 // pred_region
      _
    $region21: #{tpu_custom_call.1} parent=1 // pred_fallthru
      _
    // Predicated region
    $region22: #{tpu_custom_call.1} parent=1 // pred_check
      _
    $region23: #{tpu_custom_call.1} parent=1 // pred_check_branch
      %41 = sbr.rel (0) target = $region25
    $region24: #{tpu_custom_call.1} parent=1 // pred_region
      _
    $region25: #{tpu_custom_call.1} parent=1 // pred_fallthru
      _
    // Predicated region
    $region26: #{tpu_custom_call.1} parent=1 // pred_check
      _
    $region27: #{tpu_custom_call.1} parent=1 // pred_check_branch
      %43 = sbr.rel (0) target = $region29
    $region28: #{tpu_custom_call.1} parent=1 // pred_region
      _
    $region29: #{tpu_custom_call.1} parent=1 // pred_fallthru
      _
    // Predicated region
    $region30: #{tpu_custom_call.1} parent=1 // pred_check
      _
    $region31: #{tpu_custom_call.1} parent=1 // pred_check_branch
      %45 = sbr.rel (0) target = $region33
    $region32: #{tpu_custom_call.1} parent=1 // pred_region
      _
    $region33: #{tpu_custom_call.1} parent=1 // pred_fallthru
      _
    // Predicated region
    $region34: #{tpu_custom_call.1} parent=1 // pred_check
      _
    $region35: #{tpu_custom_call.1} parent=1 // pred_check_branch
      %47 = sbr.rel (0) target = $region37
    $region36: #{tpu_custom_call.1} parent=1 // pred_region
      _
    $region37: #{tpu_custom_call.1} parent=1 // pred_fallthru
      _
    // Predicated region
    $region38: #{tpu_custom_call.1} parent=1 // pred_check
      _
    $region39: #{tpu_custom_call.1} parent=1 // pred_check_branch
      %49 = sbr.rel (0) target = $region41
    $region40: #{tpu_custom_call.1} parent=1 // pred_region
      _
    $region41: #{tpu_custom_call.1} parent=1 // pred_fallthru
      _
    // Predicated region
    $region42: #{tpu_custom_call.1} parent=1 // pred_check
      _
    $region43: #{tpu_custom_call.1} parent=1 // pred_check_branch
      %51 = sbr.rel (0) target = $region45
    $region44: #{tpu_custom_call.1} parent=1 // pred_region
      _
    $region45: #{tpu_custom_call.1} parent=1 // pred_fallthru
      _
    // Predicated region
    $region46: #{tpu_custom_call.1} parent=1 // pred_check
      _
    $region47: #{tpu_custom_call.1} parent=1 // pred_check_branch
      %53 = sbr.rel (0) target = $region49
    $region48: #{tpu_custom_call.1} parent=1 // pred_region
      _
    $region49: #{tpu_custom_call.1} parent=1 // pred_fallthru
      _
    // Predicated region
    $region50: #{tpu_custom_call.1} parent=1 // pred_check
      _
    $region51: #{tpu_custom_call.1} parent=1 // pred_check_branch
      %55 = sbr.rel (0) target = $region53
    $region52: #{tpu_custom_call.1} parent=1 // pred_region
      _
    $region53: #{tpu_custom_call.1} parent=1 // pred_fallthru
      _
    // Predicated region
    $region54: #{tpu_custom_call.1} parent=1 // pred_check
      _
    $region55: #{tpu_custom_call.1} parent=1 // pred_check_branch
      %57 = sbr.rel (0) target = $region57
    $region56: #{tpu_custom_call.1} parent=1 // pred_region
      %58 = dma.done [#allocation3], 128
    $region57: #{tpu_custom_call.1} parent=1 // pred_fallthru
      _
    %v61 = vld [vmem:[%s1] sm:$0xf]
    %v62 = vld [vmem:[%s1 + $0x4] sm:$0xf]
    %v63 = vld [vmem:[%s1 + $0x8] sm:$0xf]
    %v64 = vld [vmem:[%s1 + $0xc] sm:$0xf]
    %v65 = vld [vmem:[%s1 + $0x10] sm:$0xf]
    %v66 = vld [vmem:[%s1 + $0x14] sm:$0xf]
    %v67 = vld [vmem:[%s1 + $0x18] sm:$0xf]
    %v68 = vld [vmem:[%s1 + $0x1c] sm:$0xf]
    %v69 = vmul.bf16 %v61, 1043676725
    %v70 = vmul.bf16 %v62, 1043676725
    %v71 = vmul.bf16 %v63, 1043676725
    %v72 = vmul.bf16 %v64, 1043676725
    %v73 = vmul.bf16 %v65, 1043676725
    %v74 = vmul.bf16 %v66, 1043676725
    %v75 = vmul.bf16 %v67, 1043676725
    %v76 = vmul.bf16 %v68, 1043676725
    %v77 = vld [vmem:[#allocation2] sm:$0x1]
    %v78 = vld [vmem:[#allocation2 + $0x1] sm:$0x1]
    %v79 = vld [vmem:[#allocation2 + $0x2] sm:$0x1]
    %v80 = vld [vmem:[#allocation2 + $0x3] sm:$0x1]
    %v81 = vld [vmem:[#allocation2 + $0x4] sm:$0x1]
    %v82 = vld [vmem:[#allocation2 + $0x5] sm:$0x1]
    %v83 = vld [vmem:[#allocation2 + $0x6] sm:$0x1]
    %v84 = vld [vmem:[#allocation2 + $0x7] sm:$0x1]
    %v93 = vlaneseq
    %v94 = vshrl.u32 %v93, 7
    %v95 = vsub.s32 0, %v94
    %v96 = vrot.slane %v77, %v95
    %v97 = vlaneseq
    %v98 = vshrl.u32 %v97, 7
    %v99 = vsub.s32 0, %v98
    %v100 = vrot.slane %v78, %v99
    %v101 = vlaneseq
    %v102 = vshrl.u32 %v101, 7
    %v103 = vsub.s32 0, %v102
    %v104 = vrot.slane %v79, %v103
    %v105 = vlaneseq
    %v106 = vshrl.u32 %v105, 7
    %v107 = vsub.s32 0, %v106
    %v108 = vrot.slane %v80, %v107
    %v109 = vlaneseq
    %v110 = vshrl.u32 %v109, 7
    %v111 = vsub.s32 0, %v110
    %v112 = vrot.slane %v81, %v111
    %v113 = vlaneseq
    %v114 = vshrl.u32 %v113, 7
    %v115 = vsub.s32 0, %v114
    %v116 = vrot.slane %v82, %v115
    %v117 = vlaneseq
    %v118 = vshrl.u32 %v117, 7
    %v119 = vsub.s32 0, %v118
    %v120 = vrot.slane %v83, %v119
    %v121 = vlaneseq
    %v122 = vshrl.u32 %v121, 7
    %v123 = vsub.s32 0, %v122
    %v124 = vrot.slane %v84, %v123
    %vm133 = vcmask 64512
    %v135 = vsel %vm133, %v69, 0
    %v138 = vsel %vm133, %v61, 0
    %140 = vmatprep.subr.bf16.mxu0 0
    %141 = vmatpush1.bf16.xpose.msra.mxu0 %v138
    %142 = vmatprep.subr.bf16.mxu0 0
    %143 = vmatpush1.bf16.xpose.msra.mxu0 0
    %144 = vmatprep.subr.bf16.mxu0 0
    %145 = vmatpush1.bf16.xpose.msra.mxu0 0
    %146 = vmatprep.subr.bf16.mxu0 0
    %147 = vmatpush1.bf16.xpose.msra.mxu0 0
    %148 = vmatprep.subr.bf16.mxu0 0
    %149 = vmatpush1.bf16.xpose.msra.mxu0 0
    %150 = vmatprep.subr.bf16.mxu0 0
    %151 = vmatpush1.bf16.xpose.msra.mxu0 0
    %152 = vmatprep.subr.bf16.mxu0 0
    %153 = vmatpush1.bf16.xpose.msra.mxu0 0
    %154 = vmatprep.subr.bf16.mxu0 0
    %155 = vmatpush1.bf16.xpose.msra.mxu0 0
    %156 = vmatprep.subr.bf16.mxu0 0
    %157 = vmatpush1.bf16.xpose.msra.mxu0 0
    %158 = vmatprep.subr.bf16.mxu0 0
    %159 = vmatpush1.bf16.xpose.msra.mxu0 0
    %160 = vmatprep.subr.bf16.mxu0 0
    %161 = vmatpush1.bf16.xpose.msra.mxu0 0
    %162 = vmatprep.subr.bf16.mxu0 0
    %163 = vmatpush1.bf16.xpose.msra.mxu0 0
    %164 = vmatprep.subr.bf16.mxu0 0
    %165 = vmatpush1.bf16.xpose.msra.mxu0 0
    %166 = vmatprep.subr.bf16.mxu0 0
    %167 = vmatpush1.bf16.xpose.msra.mxu0 0
    %168 = vmatprep.subr.bf16.mxu0 0
    %169 = vmatpush1.bf16.xpose.msra.mxu0 0
    %170 = vmatprep.subr.bf16.mxu0 0
    %171 = vmatpush1.bf16.xpose.msra.mxu0 0
    %172 = vmatprep.mubr.bf16.mxu0 0
    %173 = vmatmul.mubr.bf16.gmra.mrb[0].mxu0 %v135
    %v174 = vpop.f32.mrb[0].mxu0
    %v175 = vadd.f32 %v96, %v174
    %v176 = vpop.f32.mrb[0].mxu0
    %v177 = vpop.f32.mrb[0].mxu0
    %v178 = vpop.f32.mrb[0].mxu0
    %179 = vdwg.mxu0
    %v181 = vsel %vm133, %v70, 0
    %v184 = vsel %vm133, %v62, 0
    %186 = vmatprep.subr.bf16.mxu0 0
    %187 = vmatpush1.bf16.xpose.msra.mxu0 %v184
    %188 = vmatprep.subr.bf16.mxu0 0
    %189 = vmatpush1.bf16.xpose.msra.mxu0 0
    %190 = vmatprep.subr.bf16.mxu0 0
    %191 = vmatpush1.bf16.xpose.msra.mxu0 0
    %192 = vmatprep.subr.bf16.mxu0 0
    %193 = vmatpush1.bf16.xpose.msra.mxu0 0
    %194 = vmatprep.subr.bf16.mxu0 0
    %195 = vmatpush1.bf16.xpose.msra.mxu0 0
    %196 = vmatprep.subr.bf16.mxu0 0
    %197 = vmatpush1.bf16.xpose.msra.mxu0 0
    %198 = vmatprep.subr.bf16.mxu0 0
    %199 = vmatpush1.bf16.xpose.msra.mxu0 0
    %200 = vmatprep.subr.bf16.mxu0 0
    %201 = vmatpush1.bf16.xpose.msra.mxu0 0
    %202 = vmatprep.subr.bf16.mxu0 0
    %203 = vmatpush1.bf16.xpose.msra.mxu0 0
    %204 = vmatprep.subr.bf16.mxu0 0
    %205 = vmatpush1.bf16.xpose.msra.mxu0 0
    %206 = vmatprep.subr.bf16.mxu0 0
    %207 = vmatpush1.bf16.xpose.msra.mxu0 0
    %208 = vmatprep.subr.bf16.mxu0 0
    %209 = vmatpush1.bf16.xpose.msra.mxu0 0
    %210 = vmatprep.subr.bf16.mxu0 0
    %211 = vmatpush1.bf16.xpose.msra.mxu0 0
    %212 = vmatprep.subr.bf16.mxu0 0
    %213 = vmatpush1.bf16.xpose.msra.mxu0 0
    %214 = vmatprep.subr.bf16.mxu0 0
    %215 = vmatpush1.bf16.xpose.msra.mxu0 0
    %216 = vmatprep.subr.bf16.mxu0 0
    %217 = vmatpush1.bf16.xpose.msra.mxu0 0
    %218 = vmatprep.mubr.bf16.mxu0 0
    %219 = vmatmul.mubr.bf16.gmra.mrb[0].mxu0 %v181
    %v220 = vpop.f32.mrb[0].mxu0
    %v221 = vadd.f32 %v100, %v220
    %v222 = vpop.f32.mrb[0].mxu0
    %v223 = vpop.f32.mrb[0].mxu0
    %v224 = vpop.f32.mrb[0].mxu0
    %225 = vdwg.mxu0
    %v227 = vsel %vm133, %v71, 0
    %v230 = vsel %vm133, %v63, 0
    %232 = vmatprep.subr.bf16.mxu0 0
    %233 = vmatpush1.bf16.xpose.msra.mxu0 %v230
    %234 = vmatprep.subr.bf16.mxu0 0
    %235 = vmatpush1.bf16.xpose.msra.mxu0 0
    %236 = vmatprep.subr.bf16.mxu0 0
    %237 = vmatpush1.bf16.xpose.msra.mxu0 0
    %238 = vmatprep.subr.bf16.mxu0 0
    %239 = vmatpush1.bf16.xpose.msra.mxu0 0
    %240 = vmatprep.subr.bf16.mxu0 0
    %241 = vmatpush1.bf16.xpose.msra.mxu0 0
    %242 = vmatprep.subr.bf16.mxu0 0
    %243 = vmatpush1.bf16.xpose.msra.mxu0 0
    %244 = vmatprep.subr.bf16.mxu0 0
    %245 = vmatpush1.bf16.xpose.msra.mxu0 0
    %246 = vmatprep.subr.bf16.mxu0 0
    %247 = vmatpush1.bf16.xpose.msra.mxu0 0
    %248 = vmatprep.subr.bf16.mxu0 0
    %249 = vmatpush1.bf16.xpose.msra.mxu0 0
    %250 = vmatprep.subr.bf16.mxu0 0
    %251 = vmatpush1.bf16.xpose.msra.mxu0 0
    %252 = vmatprep.subr.bf16.mxu0 0
    %253 = vmatpush1.bf16.xpose.msra.mxu0 0
    %254 = vmatprep.subr.bf16.mxu0 0
    %255 = vmatpush1.bf16.xpose.msra.mxu0 0
    %256 = vmatprep.subr.bf16.mxu0 0
    %257 = vmatpush1.bf16.xpose.msra.mxu0 0
    %258 = vmatprep.subr.bf16.mxu0 0
    %259 = vmatpush1.bf16.xpose.msra.mxu0 0
    %260 = vmatprep.subr.bf16.mxu0 0
    %261 = vmatpush1.bf16.xpose.msra.mxu0 0
    %262 = vmatprep.subr.bf16.mxu0 0
    %263 = vmatpush1.bf16.xpose.msra.mxu0 0
    %264 = vmatprep.mubr.bf16.mxu0 0
    %265 = vmatmul.mubr.bf16.gmra.mrb[0].mxu0 %v227
    %v266 = vpop.f32.mrb[0].mxu0
    %v267 = vadd.f32 %v104, %v266
    %v268 = vpop.f32.mrb[0].mxu0
    %v269 = vpop.f32.mrb[0].mxu0
    %v270 = vpop.f32.mrb[0].mxu0
    %271 = vdwg.mxu0
    %v273 = vsel %vm133, %v72, 0
    %v276 = vsel %vm133, %v64, 0
    %278 = vmatprep.subr.bf16.mxu0 0
    %279 = vmatpush1.bf16.xpose.msra.mxu0 %v276
    %280 = vmatprep.subr.bf16.mxu0 0
    %281 = vmatpush1.bf16.xpose.msra.mxu0 0
    %282 = vmatprep.subr.bf16.mxu0 0
    %283 = vmatpush1.bf16.xpose.msra.mxu0 0
    %284 = vmatprep.subr.bf16.mxu0 0
    %285 = vmatpush1.bf16.xpose.msra.mxu0 0
    %286 = vmatprep.subr.bf16.mxu0 0
    %287 = vmatpush1.bf16.xpose.msra.mxu0 0
    %288 = vmatprep.subr.bf16.mxu0 0
    %289 = vmatpush1.bf16.xpose.msra.mxu0 0
    %290 = vmatprep.subr.bf16.mxu0 0
    %291 = vmatpush1.bf16.xpose.msra.mxu0 0
    %292 = vmatprep.subr.bf16.mxu0 0
    %293 = vmatpush1.bf16.xpose.msra.mxu0 0
    %294 = vmatprep.subr.bf16.mxu0 0
    %295 = vmatpush1.bf16.xpose.msra.mxu0 0
    %296 = vmatprep.subr.bf16.mxu0 0
    %297 = vmatpush1.bf16.xpose.msra.mxu0 0
    %298 = vmatprep.subr.bf16.mxu0 0
    %299 = vmatpush1.bf16.xpose.msra.mxu0 0
    %300 = vmatprep.subr.bf16.mxu0 0
    %301 = vmatpush1.bf16.xpose.msra.mxu0 0
    %302 = vmatprep.subr.bf16.mxu0 0
    %303 = vmatpush1.bf16.xpose.msra.mxu0 0
    %304 = vmatprep.subr.bf16.mxu0 0
    %305 = vmatpush1.bf16.xpose.msra.mxu0 0
    %306 = vmatprep.subr.bf16.mxu0 0
    %307 = vmatpush1.bf16.xpose.msra.mxu0 0
    %308 = vmatprep.subr.bf16.mxu0 0
    %309 = vmatpush1.bf16.xpose.msra.mxu0 0
    %310 = vmatprep.mubr.bf16.mxu0 0
    %311 = vmatmul.mubr.bf16.gmra.mrb[0].mxu0 %v273
    %v312 = vpop.f32.mrb[0].mxu0
    %v313 = vadd.f32 %v108, %v312
    %v314 = vpop.f32.mrb[0].mxu0
    %v315 = vpop.f32.mrb[0].mxu0
    %v316 = vpop.f32.mrb[0].mxu0
    %317 = vdwg.mxu0
    %v319 = vsel %vm133, %v73, 0
    %v322 = vsel %vm133, %v65, 0
    %324 = vmatprep.subr.bf16.mxu0 0
    %325 = vmatpush1.bf16.xpose.msra.mxu0 %v322
    %326 = vmatprep.subr.bf16.mxu0 0
    %327 = vmatpush1.bf16.xpose.msra.mxu0 0
    %328 = vmatprep.subr.bf16.mxu0 0
    %329 = vmatpush1.bf16.xpose.msra.mxu0 0
    %330 = vmatprep.subr.bf16.mxu0 0
    %331 = vmatpush1.bf16.xpose.msra.mxu0 0
    %332 = vmatprep.subr.bf16.mxu0 0
    %333 = vmatpush1.bf16.xpose.msra.mxu0 0
    %334 = vmatprep.subr.bf16.mxu0 0
    %335 = vmatpush1.bf16.xpose.msra.mxu0 0
    %336 = vmatprep.subr.bf16.mxu0 0
    %337 = vmatpush1.bf16.xpose.msra.mxu0 0
    %338 = vmatprep.subr.bf16.mxu0 0
    %339 = vmatpush1.bf16.xpose.msra.mxu0 0
    %340 = vmatprep.subr.bf16.mxu0 0
    %341 = vmatpush1.bf16.xpose.msra.mxu0 0
    %342 = vmatprep.subr.bf16.mxu0 0
    %343 = vmatpush1.bf16.xpose.msra.mxu0 0
    %344 = vmatprep.subr.bf16.mxu0 0
    %345 = vmatpush1.bf16.xpose.msra.mxu0 0
    %346 = vmatprep.subr.bf16.mxu0 0
    %347 = vmatpush1.bf16.xpose.msra.mxu0 0
    %348 = vmatprep.subr.bf16.mxu0 0
    %349 = vmatpush1.bf16.xpose.msra.mxu0 0
    %350 = vmatprep.subr.bf16.mxu0 0
    %351 = vmatpush1.bf16.xpose.msra.mxu0 0
    %352 = vmatprep.subr.bf16.mxu0 0
    %353 = vmatpush1.bf16.xpose.msra.mxu0 0
    %354 = vmatprep.subr.bf16.mxu0 0
    %355 = vmatpush1.bf16.xpose.msra.mxu0 0
    %356 = vmatprep.mubr.bf16.mxu0 0
    %357 = vmatmul.mubr.bf16.gmra.mrb[0].mxu0 %v319
    %v358 = vpop.f32.mrb[0].mxu0
    %v359 = vadd.f32 %v112, %v358
    %v360 = vpop.f32.mrb[0].mxu0
    %v361 = vpop.f32.mrb[0].mxu0
    %v362 = vpop.f32.mrb[0].mxu0
    %363 = vdwg.mxu0
    %v365 = vsel %vm133, %v74, 0
    %v368 = vsel %vm133, %v66, 0
    %370 = vmatprep.subr.bf16.mxu0 0
    %371 = vmatpush1.bf16.xpose.msra.mxu0 %v368
    %372 = vmatprep.subr.bf16.mxu0 0
    %373 = vmatpush1.bf16.xpose.msra.mxu0 0
    %374 = vmatprep.subr.bf16.mxu0 0
    %375 = vmatpush1.bf16.xpose.msra.mxu0 0
    %376 = vmatprep.subr.bf16.mxu0 0
    %377 = vmatpush1.bf16.xpose.msra.mxu0 0
    %378 = vmatprep.subr.bf16.mxu0 0
    %379 = vmatpush1.bf16.xpose.msra.mxu0 0
    %380 = vmatprep.subr.bf16.mxu0 0
    %381 = vmatpush1.bf16.xpose.msra.mxu0 0
    %382 = vmatprep.subr.bf16.mxu0 0
    %383 = vmatpush1.bf16.xpose.msra.mxu0 0
    %384 = vmatprep.subr.bf16.mxu0 0
    %385 = vmatpush1.bf16.xpose.msra.mxu0 0
    %386 = vmatprep.subr.bf16.mxu0 0
    %387 = vmatpush1.bf16.xpose.msra.mxu0 0
    %388 = vmatprep.subr.bf16.mxu0 0
    %389 = vmatpush1.bf16.xpose.msra.mxu0 0
    %390 = vmatprep.subr.bf16.mxu0 0
    %391 = vmatpush1.bf16.xpose.msra.mxu0 0
    %392 = vmatprep.subr.bf16.mxu0 0
    %393 = vmatpush1.bf16.xpose.msra.mxu0 0
    %394 = vmatprep.subr.bf16.mxu0 0
    %395 = vmatpush1.bf16.xpose.msra.mxu0 0
    %396 = vmatprep.subr.bf16.mxu0 0
    %397 = vmatpush1.bf16.xpose.msra.mxu0 0
    %398 = vmatprep.subr.bf16.mxu0 0
    %399 = vmatpush1.bf16.xpose.msra.mxu0 0
    %400 = vmatprep.subr.bf16.mxu0 0
    %401 = vmatpush1.bf16.xpose.msra.mxu0 0
    %402 = vmatprep.mubr.bf16.mxu0 0
    %403 = vmatmul.mubr.bf16.gmra.mrb[0].mxu0 %v365
    %v404 = vpop.f32.mrb[0].mxu0
    %v405 = vadd.f32 %v116, %v404
    %v406 = vpop.f32.mrb[0].mxu0
    %v407 = vpop.f32.mrb[0].mxu0
    %v408 = vpop.f32.mrb[0].mxu0
    %409 = vdwg.mxu0
    %v411 = vsel %vm133, %v75, 0
    %v414 = vsel %vm133, %v67, 0
    %416 = vmatprep.subr.bf16.mxu0 0
    %417 = vmatpush1.bf16.xpose.msra.mxu0 %v414
    %418 = vmatprep.subr.bf16.mxu0 0
    %419 = vmatpush1.bf16.xpose.msra.mxu0 0
    %420 = vmatprep.subr.bf16.mxu0 0
    %421 = vmatpush1.bf16.xpose.msra.mxu0 0
    %422 = vmatprep.subr.bf16.mxu0 0
    %423 = vmatpush1.bf16.xpose.msra.mxu0 0
    %424 = vmatprep.subr.bf16.mxu0 0
    %425 = vmatpush1.bf16.xpose.msra.mxu0 0
    %426 = vmatprep.subr.bf16.mxu0 0
    %427 = vmatpush1.bf16.xpose.msra.mxu0 0
    %428 = vmatprep.subr.bf16.mxu0 0
    %429 = vmatpush1.bf16.xpose.msra.mxu0 0
    %430 = vmatprep.subr.bf16.mxu0 0
    %431 = vmatpush1.bf16.xpose.msra.mxu0 0
    %432 = vmatprep.subr.bf16.mxu0 0
    %433 = vmatpush1.bf16.xpose.msra.mxu0 0
    %434 = vmatprep.subr.bf16.mxu0 0
    %435 = vmatpush1.bf16.xpose.msra.mxu0 0
    %436 = vmatprep.subr.bf16.mxu0 0
    %437 = vmatpush1.bf16.xpose.msra.mxu0 0
    %438 = vmatprep.subr.bf16.mxu0 0
    %439 = vmatpush1.bf16.xpose.msra.mxu0 0
    %440 = vmatprep.subr.bf16.mxu0 0
    %441 = vmatpush1.bf16.xpose.msra.mxu0 0
    %442 = vmatprep.subr.bf16.mxu0 0
    %443 = vmatpush1.bf16.xpose.msra.mxu0 0
    %444 = vmatprep.subr.bf16.mxu0 0
    %445 = vmatpush1.bf16.xpose.msra.mxu0 0
    %446 = vmatprep.subr.bf16.mxu0 0
    %447 = vmatpush1.bf16.xpose.msra.mxu0 0
    %448 = vmatprep.mubr.bf16.mxu0 0
    %449 = vmatmul.mubr.bf16.gmra.mrb[0].mxu0 %v411
    %v450 = vpop.f32.mrb[0].mxu0
    %v451 = vadd.f32 %v120, %v450
    %v452 = vpop.f32.mrb[0].mxu0
    %v453 = vpop.f32.mrb[0].mxu0
    %v454 = vpop.f32.mrb[0].mxu0
    %455 = vdwg.mxu0
    %v457 = vsel %vm133, %v76, 0
    %v460 = vsel %vm133, %v68, 0
    %462 = vmatprep.subr.bf16.mxu0 0
    %463 = vmatpush1.bf16.xpose.msra.mxu0 %v460
    %464 = vmatprep.subr.bf16.mxu0 0
    %465 = vmatpush1.bf16.xpose.msra.mxu0 0
    %466 = vmatprep.subr.bf16.mxu0 0
    %467 = vmatpush1.bf16.xpose.msra.mxu0 0
    %468 = vmatprep.subr.bf16.mxu0 0
    %469 = vmatpush1.bf16.xpose.msra.mxu0 0
    %470 = vmatprep.subr.bf16.mxu0 0
    %471 = vmatpush1.bf16.xpose.msra.mxu0 0
    %472 = vmatprep.subr.bf16.mxu0 0
    %473 = vmatpush1.bf16.xpose.msra.mxu0 0
    %474 = vmatprep.subr.bf16.mxu0 0
    %475 = vmatpush1.bf16.xpose.msra.mxu0 0
    %476 = vmatprep.subr.bf16.mxu0 0
    %477 = vmatpush1.bf16.xpose.msra.mxu0 0
    %478 = vmatprep.subr.bf16.mxu0 0
    %479 = vmatpush1.bf16.xpose.msra.mxu0 0
    %480 = vmatprep.subr.bf16.mxu0 0
    %481 = vmatpush1.bf16.xpose.msra.mxu0 0
    %482 = vmatprep.subr.bf16.mxu0 0
    %483 = vmatpush1.bf16.xpose.msra.mxu0 0
    %484 = vmatprep.subr.bf16.mxu0 0
    %485 = vmatpush1.bf16.xpose.msra.mxu0 0
    %486 = vmatprep.subr.bf16.mxu0 0
    %487 = vmatpush1.bf16.xpose.msra.mxu0 0
    %488 = vmatprep.subr.bf16.mxu0 0
    %489 = vmatpush1.bf16.xpose.msra.mxu0 0
    %490 = vmatprep.subr.bf16.mxu0 0
    %491 = vmatpush1.bf16.xpose.msra.mxu0 0
    %492 = vmatprep.subr.bf16.mxu0 0
    %493 = vmatpush1.bf16.xpose.msra.mxu0 0
    %494 = vmatprep.mubr.bf16.mxu0 0
    %495 = vmatmul.mubr.bf16.gmra.mrb[0].mxu0 %v457
    %v496 = vpop.f32.mrb[0].mxu0
    %v497 = vadd.f32 %v124, %v496
    %v498 = vpop.f32.mrb[0].mxu0
    %v499 = vpop.f32.mrb[0].mxu0
    %v500 = vpop.f32.mrb[0].mxu0
    %501 = vdwg.mxu0
    %v502 = vsel %vm133, %v175, -inf
    %503 = vmax.xlane.f32.xlu0 %v502
    %v504 = vpop.xlane.xlu0 %503
    %v505 = vsel %vm133, %v221, -inf
    %506 = vmax.xlane.f32.xlu0 %v505
    %v507 = vpop.xlane.xlu0 %506
    %v508 = vsel %vm133, %v267, -inf
    %509 = vmax.xlane.f32.xlu0 %v508
    %v510 = vpop.xlane.xlu0 %509
    %v511 = vsel %vm133, %v313, -inf
    %512 = vmax.xlane.f32.xlu0 %v511
    %v513 = vpop.xlane.xlu0 %512
    %v514 = vsel %vm133, %v359, -inf
    %515 = vmax.xlane.f32.xlu0 %v514
    %v516 = vpop.xlane.xlu0 %515
    %v517 = vsel %vm133, %v405, -inf
    %518 = vmax.xlane.f32.xlu0 %v517
    %v519 = vpop.xlane.xlu0 %518
    %v520 = vsel %vm133, %v451, -inf
    %521 = vmax.xlane.f32.xlu0 %v520
    %v522 = vpop.xlane.xlu0 %521
    %v523 = vsel %vm133, %v497, -inf
    %524 = vmax.xlane.f32.xlu0 %v523
    %v525 = vpop.xlane.xlu0 %524
    %v526 = vsub.f32 %v175, %v504
    %v527 = vsub.f32 %v221, %v507
    %v528 = vsub.f32 %v267, %v510
    %v529 = vsub.f32 %v313, %v513
    %v530 = vsub.f32 %v359, %v516
    %v531 = vsub.f32 %v405, %v519
    %v532 = vsub.f32 %v451, %v522
    %v533 = vsub.f32 %v497, %v525
    %v534 = vmul.f32 %v526, 1.442695
    %v535 = vpow.pop %v534
    %v536 = vmul.f32 %v527, 1.442695
    %v537 = vpow.pop %v536
    %v538 = vmul.f32 %v528, 1.442695
    %v539 = vpow.pop %v538
    %v540 = vmul.f32 %v529, 1.442695
    %v541 = vpow.pop %v540
    %v542 = vmul.f32 %v530, 1.442695
    %v543 = vpow.pop %v542
    %v544 = vmul.f32 %v531, 1.442695
    %v545 = vpow.pop %v544
    %v546 = vmul.f32 %v532, 1.442695
    %v547 = vpow.pop %v546
    %v548 = vmul.f32 %v533, 1.442695
    %v549 = vpow.pop %v548
    %v550 = vsel %vm133, %v535, 0.0
    %551 = vadd.xlane.f32.xlu0 %v550
    %v552 = vpop.xlane.xlu0 %551
    %v553 = vsel %vm133, %v537, 0.0
    %554 = vadd.xlane.f32.xlu0 %v553
    %v555 = vpop.xlane.xlu0 %554
    %v556 = vsel %vm133, %v539, 0.0
    %557 = vadd.xlane.f32.xlu0 %v556
    %v558 = vpop.xlane.xlu0 %557
    %v559 = vsel %vm133, %v541, 0.0
    %560 = vadd.xlane.f32.xlu0 %v559
    %v561 = vpop.xlane.xlu0 %560
    %v562 = vsel %vm133, %v543, 0.0
    %563 = vadd.xlane.f32.xlu0 %v562
    %v564 = vpop.xlane.xlu0 %563
    %v565 = vsel %vm133, %v545, 0.0
    %566 = vadd.xlane.f32.xlu0 %v565
    %v567 = vpop.xlane.xlu0 %566
    %v568 = vsel %vm133, %v547, 0.0
    %569 = vadd.xlane.f32.xlu0 %v568
    %v570 = vpop.xlane.xlu0 %569
    %v571 = vsel %vm133, %v549, 0.0
    %572 = vadd.xlane.f32.xlu0 %v571
    %v573 = vpop.xlane.xlu0 %572
    %v574 = vrcp.pop %v552
    %v575 = vrcp.pop %v555
    %v576 = vrcp.pop %v558
    %v577 = vrcp.pop %v561
    %v578 = vrcp.pop %v564
    %v579 = vrcp.pop %v567
    %v580 = vrcp.pop %v570
    %v581 = vrcp.pop %v573
    %v582 = vmul.f32 %v535, %v574
    %v583 = vmul.f32 %v537, %v575
    %v584 = vmul.f32 %v539, %v576
    %v585 = vmul.f32 %v541, %v577
    %v586 = vmul.f32 %v543, %v578
    %v587 = vmul.f32 %v545, %v579
    %v588 = vmul.f32 %v547, %v580
    %v589 = vmul.f32 %v549, %v581
    %v590 = vpack.c.bf16 %v582, %v582
    %v591 = vpack.c.bf16 %v583, %v583
    %v592 = vpack.c.bf16 %v584, %v584
    %v593 = vpack.c.bf16 %v585, %v585
    %v594 = vpack.c.bf16 %v586, %v586
    %v595 = vpack.c.bf16 %v587, %v587
    %v596 = vpack.c.bf16 %v588, %v588
    %v597 = vpack.c.bf16 %v589, %v589
    %v599 = vsel %vm133, %v590, 0
    %vm601 = vcmask 1043456
    %v602 = vsel %vm601, %v61, 0
    %604 = vmatprep.subr.bf16.mxu0 0
    %605 = vmatpush1.bf16.msra.mxu0 %v602
    %606 = vmatprep.subr.bf16.mxu0 0
    %607 = vmatpush1.bf16.msra.mxu0 0
    %608 = vmatprep.subr.bf16.mxu0 0
    %609 = vmatpush1.bf16.msra.mxu0 0
    %610 = vmatprep.subr.bf16.mxu0 0
    %611 = vmatpush1.bf16.msra.mxu0 0
    %612 = vmatprep.subr.bf16.mxu0 0
    %613 = vmatpush1.bf16.msra.mxu0 0
    %614 = vmatprep.subr.bf16.mxu0 0
    %615 = vmatpush1.bf16.msra.mxu0 0
    %616 = vmatprep.subr.bf16.mxu0 0
    %617 = vmatpush1.bf16.msra.mxu0 0
    %618 = vmatprep.subr.bf16.mxu0 0
    %619 = vmatpush1.bf16.msra.mxu0 0
    %620 = vmatprep.subr.bf16.mxu0 0
    %621 = vmatpush1.bf16.msra.mxu0 0
    %622 = vmatprep.subr.bf16.mxu0 0
    %623 = vmatpush1.bf16.msra.mxu0 0
    %624 = vmatprep.subr.bf16.mxu0 0
    %625 = vmatpush1.bf16.msra.mxu0 0
    %626 = vmatprep.subr.bf16.mxu0 0
    %627 = vmatpush1.bf16.msra.mxu0 0
    %628 = vmatprep.subr.bf16.mxu0 0
    %629 = vmatpush1.bf16.msra.mxu0 0
    %630 = vmatprep.subr.bf16.mxu0 0
    %631 = vmatpush1.bf16.msra.mxu0 0
    %632 = vmatprep.subr.bf16.mxu0 0
    %633 = vmatpush1.bf16.msra.mxu0 0
    %634 = vmatprep.subr.bf16.mxu0 0
    %635 = vmatpush1.bf16.msra.mxu0 0
    %636 = vmatprep.mubr.bf16.mxu0 0
    %637 = vmatmul.mubr.bf16.gmra.mrb[0].mxu0 %v599
    %v638 = vpop.f32.mrb[0].mxu0
    %v639 = vadd.f32 0.0, %v638
    %v640 = vpop.f32.mrb[0].mxu0
    %v641 = vpop.f32.mrb[0].mxu0
    %v642 = vpop.f32.mrb[0].mxu0
    %643 = vdwg.mxu0
    %v645 = vsel %vm133, %v591, 0
    %v647 = vsel %vm601, %v62, 0
    %649 = vmatprep.subr.bf16.mxu0 0
    %650 = vmatpush1.bf16.msra.mxu0 %v647
    %651 = vmatprep.subr.bf16.mxu0 0
    %652 = vmatpush1.bf16.msra.mxu0 0
    %653 = vmatprep.subr.bf16.mxu0 0
    %654 = vmatpush1.bf16.msra.mxu0 0
    %655 = vmatprep.subr.bf16.mxu0 0
    %656 = vmatpush1.bf16.msra.mxu0 0
    %657 = vmatprep.subr.bf16.mxu0 0
    %658 = vmatpush1.bf16.msra.mxu0 0
    %659 = vmatprep.subr.bf16.mxu0 0
    %660 = vmatpush1.bf16.msra.mxu0 0
    %661 = vmatprep.subr.bf16.mxu0 0
    %662 = vmatpush1.bf16.msra.mxu0 0
    %663 = vmatprep.subr.bf16.mxu0 0
    %664 = vmatpush1.bf16.msra.mxu0 0
    %665 = vmatprep.subr.bf16.mxu0 0
    %666 = vmatpush1.bf16.msra.mxu0 0
    %667 = vmatprep.subr.bf16.mxu0 0
    %668 = vmatpush1.bf16.msra.mxu0 0
    %669 = vmatprep.subr.bf16.mxu0 0
    %670 = vmatpush1.bf16.msra.mxu0 0
    %671 = vmatprep.subr.bf16.mxu0 0
    %672 = vmatpush1.bf16.msra.mxu0 0
    %673 = vmatprep.subr.bf16.mxu0 0
    %674 = vmatpush1.bf16.msra.mxu0 0
    %675 = vmatprep.subr.bf16.mxu0 0
    %676 = vmatpush1.bf16.msra.mxu0 0
    %677 = vmatprep.subr.bf16.mxu0 0
    %678 = vmatpush1.bf16.msra.mxu0 0
    %679 = vmatprep.subr.bf16.mxu0 0
    %680 = vmatpush1.bf16.msra.mxu0 0
    %681 = vmatprep.mubr.bf16.mxu0 0
    %682 = vmatmul.mubr.bf16.gmra.mrb[0].mxu0 %v645
    %v683 = vpop.f32.mrb[0].mxu0
    %v684 = vadd.f32 0.0, %v683
    %v685 = vpop.f32.mrb[0].mxu0
    %v686 = vpop.f32.mrb[0].mxu0
    %v687 = vpop.f32.mrb[0].mxu0
    %688 = vdwg.mxu0
    %v690 = vsel %vm133, %v592, 0
    %v692 = vsel %vm601, %v63, 0
    %694 = vmatprep.subr.bf16.mxu0 0
    %695 = vmatpush1.bf16.msra.mxu0 %v692
    %696 = vmatprep.subr.bf16.mxu0 0
    %697 = vmatpush1.bf16.msra.mxu0 0
    %698 = vmatprep.subr.bf16.mxu0 0
    %699 = vmatpush1.bf16.msra.mxu0 0
    %700 = vmatprep.subr.bf16.mxu0 0
    %701 = vmatpush1.bf16.msra.mxu0 0
    %702 = vmatprep.subr.bf16.mxu0 0
    %703 = vmatpush1.bf16.msra.mxu0 0
    %704 = vmatprep.subr.bf16.mxu0 0
    %705 = vmatpush1.bf16.msra.mxu0 0
    %706 = vmatprep.subr.bf16.mxu0 0
    %707 = vmatpush1.bf16.msra.mxu0 0
    %708 = vmatprep.subr.bf16.mxu0 0
    %709 = vmatpush1.bf16.msra.mxu0 0
    %710 = vmatprep.subr.bf16.mxu0 0
    %711 = vmatpush1.bf16.msra.mxu0 0
    %712 = vmatprep.subr.bf16.mxu0 0
    %713 = vmatpush1.bf16.msra.mxu0 0
    %714 = vmatprep.subr.bf16.mxu0 0
    %715 = vmatpush1.bf16.msra.mxu0 0
    %716 = vmatprep.subr.bf16.mxu0 0
    %717 = vmatpush1.bf16.msra.mxu0 0
    %718 = vmatprep.subr.bf16.mxu0 0
    %719 = vmatpush1.bf16.msra.mxu0 0
    %720 = vmatprep.subr.bf16.mxu0 0
    %721 = vmatpush1.bf16.msra.mxu0 0
    %722 = vmatprep.subr.bf16.mxu0 0
    %723 = vmatpush1.bf16.msra.mxu0 0
    %724 = vmatprep.subr.bf16.mxu0 0
    %725 = vmatpush1.bf16.msra.mxu0 0
    %726 = vmatprep.mubr.bf16.mxu0 0
    %727 = vmatmul.mubr.bf16.gmra.mrb[0].mxu0 %v690
    %v728 = vpop.f32.mrb[0].mxu0
    %v729 = vadd.f32 0.0, %v728
    %v730 = vpop.f32.mrb[0].mxu0
    %v731 = vpop.f32.mrb[0].mxu0
    %v732 = vpop.f32.mrb[0].mxu0
    %733 = vdwg.mxu0
    %v735 = vsel %vm133, %v593, 0
    %v737 = vsel %vm601, %v64, 0
    %739 = vmatprep.subr.bf16.mxu0 0
    %740 = vmatpush1.bf16.msra.mxu0 %v737
    %741 = vmatprep.subr.bf16.mxu0 0
    %742 = vmatpush1.bf16.msra.mxu0 0
    %743 = vmatprep.subr.bf16.mxu0 0
    %744 = vmatpush1.bf16.msra.mxu0 0
    %745 = vmatprep.subr.bf16.mxu0 0
    %746 = vmatpush1.bf16.msra.mxu0 0
    %747 = vmatprep.subr.bf16.mxu0 0
    %748 = vmatpush1.bf16.msra.mxu0 0
    %749 = vmatprep.subr.bf16.mxu0 0
    %750 = vmatpush1.bf16.msra.mxu0 0
    %751 = vmatprep.subr.bf16.mxu0 0
    %752 = vmatpush1.bf16.msra.mxu0 0
    %753 = vmatprep.subr.bf16.mxu0 0
    %754 = vmatpush1.bf16.msra.mxu0 0
    %755 = vmatprep.subr.bf16.mxu0 0
    %756 = vmatpush1.bf16.msra.mxu0 0
    %757 = vmatprep.subr.bf16.mxu0 0
    %758 = vmatpush1.bf16.msra.mxu0 0
    %759 = vmatprep.subr.bf16.mxu0 0
    %760 = vmatpush1.bf16.msra.mxu0 0
    %761 = vmatprep.subr.bf16.mxu0 0
    %762 = vmatpush1.bf16.msra.mxu0 0
    %763 = vmatprep.subr.bf16.mxu0 0
    %764 = vmatpush1.bf16.msra.mxu0 0
    %765 = vmatprep.subr.bf16.mxu0 0
    %766 = vmatpush1.bf16.msra.mxu0 0
    %767 = vmatprep.subr.bf16.mxu0 0
    %768 = vmatpush1.bf16.msra.mxu0 0
    %769 = vmatprep.subr.bf16.mxu0 0
    %770 = vmatpush1.bf16.msra.mxu0 0
    %771 = vmatprep.mubr.bf16.mxu0 0
    %772 = vmatmul.mubr.bf16.gmra.mrb[0].mxu0 %v735
    %v773 = vpop.f32.mrb[0].mxu0
    %v774 = vadd.f32 0.0, %v773
    %v775 = vpop.f32.mrb[0].mxu0
    %v776 = vpop.f32.mrb[0].mxu0
    %v777 = vpop.f32.mrb[0].mxu0
    %778 = vdwg.mxu0
    %v780 = vsel %vm133, %v594, 0
    %v782 = vsel %vm601, %v65, 0
    %784 = vmatprep.subr.bf16.mxu0 0
    %785 = vmatpush1.bf16.msra.mxu0 %v782
    %786 = vmatprep.subr.bf16.mxu0 0
    %787 = vmatpush1.bf16.msra.mxu0 0
    %788 = vmatprep.subr.bf16.mxu0 0
    %789 = vmatpush1.bf16.msra.mxu0 0
    %790 = vmatprep.subr.bf16.mxu0 0
    %791 = vmatpush1.bf16.msra.mxu0 0
    %792 = vmatprep.subr.bf16.mxu0 0
    %793 = vmatpush1.bf16.msra.mxu0 0
    %794 = vmatprep.subr.bf16.mxu0 0
    %795 = vmatpush1.bf16.msra.mxu0 0
    %796 = vmatprep.subr.bf16.mxu0 0
    %797 = vmatpush1.bf16.msra.mxu0 0
    %798 = vmatprep.subr.bf16.mxu0 0
    %799 = vmatpush1.bf16.msra.mxu0 0
    %800 = vmatprep.subr.bf16.mxu0 0
    %801 = vmatpush1.bf16.msra.mxu0 0
    %802 = vmatprep.subr.bf16.mxu0 0
    %803 = vmatpush1.bf16.msra.mxu0 0
    %804 = vmatprep.subr.bf16.mxu0 0
    %805 = vmatpush1.bf16.msra.mxu0 0
    %806 = vmatprep.subr.bf16.mxu0 0
    %807 = vmatpush1.bf16.msra.mxu0 0
    %808 = vmatprep.subr.bf16.mxu0 0
    %809 = vmatpush1.bf16.msra.mxu0 0
    %810 = vmatprep.subr.bf16.mxu0 0
    %811 = vmatpush1.bf16.msra.mxu0 0
    %812 = vmatprep.subr.bf16.mxu0 0
    %813 = vmatpush1.bf16.msra.mxu0 0
    %814 = vmatprep.subr.bf16.mxu0 0
    %815 = vmatpush1.bf16.msra.mxu0 0
    %816 = vmatprep.mubr.bf16.mxu0 0
    %817 = vmatmul.mubr.bf16.gmra.mrb[0].mxu0 %v780
    %v818 = vpop.f32.mrb[0].mxu0
    %v819 = vadd.f32 0.0, %v818
    %v820 = vpop.f32.mrb[0].mxu0
    %v821 = vpop.f32.mrb[0].mxu0
    %v822 = vpop.f32.mrb[0].mxu0
    %823 = vdwg.mxu0
    %v825 = vsel %vm133, %v595, 0
    %v827 = vsel %vm601, %v66, 0
    %829 = vmatprep.subr.bf16.mxu0 0
    %830 = vmatpush1.bf16.msra.mxu0 %v827
    %831 = vmatprep.subr.bf16.mxu0 0
    %832 = vmatpush1.bf16.msra.mxu0 0
    %833 = vmatprep.subr.bf16.mxu0 0
    %834 = vmatpush1.bf16.msra.mxu0 0
    %835 = vmatprep.subr.bf16.mxu0 0
    %836 = vmatpush1.bf16.msra.mxu0 0
    %837 = vmatprep.subr.bf16.mxu0 0
    %838 = vmatpush1.bf16.msra.mxu0 0
    %839 = vmatprep.subr.bf16.mxu0 0
    %840 = vmatpush1.bf16.msra.mxu0 0
    %841 = vmatprep.subr.bf16.mxu0 0
    %842 = vmatpush1.bf16.msra.mxu0 0
    %843 = vmatprep.subr.bf16.mxu0 0
    %844 = vmatpush1.bf16.msra.mxu0 0
    %845 = vmatprep.subr.bf16.mxu0 0
    %846 = vmatpush1.bf16.msra.mxu0 0
    %847 = vmatprep.subr.bf16.mxu0 0
    %848 = vmatpush1.bf16.msra.mxu0 0
    %849 = vmatprep.subr.bf16.mxu0 0
    %850 = vmatpush1.bf16.msra.mxu0 0
    %851 = vmatprep.subr.bf16.mxu0 0
    %852 = vmatpush1.bf16.msra.mxu0 0
    %853 = vmatprep.subr.bf16.mxu0 0
    %854 = vmatpush1.bf16.msra.mxu0 0
    %855 = vmatprep.subr.bf16.mxu0 0
    %856 = vmatpush1.bf16.msra.mxu0 0
    %857 = vmatprep.subr.bf16.mxu0 0
    %858 = vmatpush1.bf16.msra.mxu0 0
    %859 = vmatprep.subr.bf16.mxu0 0
    %860 = vmatpush1.bf16.msra.mxu0 0
    %861 = vmatprep.mubr.bf16.mxu0 0
    %862 = vmatmul.mubr.bf16.gmra.mrb[0].mxu0 %v825
    %v863 = vpop.f32.mrb[0].mxu0
    %v864 = vadd.f32 0.0, %v863
    %v865 = vpop.f32.mrb[0].mxu0
    %v866 = vpop.f32.mrb[0].mxu0
    %v867 = vpop.f32.mrb[0].mxu0
    %868 = vdwg.mxu0
    %v870 = vsel %vm133, %v596, 0
    %v872 = vsel %vm601, %v67, 0
    %874 = vmatprep.subr.bf16.mxu0 0
    %875 = vmatpush1.bf16.msra.mxu0 %v872
    %876 = vmatprep.subr.bf16.mxu0 0
    %877 = vmatpush1.bf16.msra.mxu0 0
    %878 = vmatprep.subr.bf16.mxu0 0
    %879 = vmatpush1.bf16.msra.mxu0 0
    %880 = vmatprep.subr.bf16.mxu0 0
    %881 = vmatpush1.bf16.msra.mxu0 0
    %882 = vmatprep.subr.bf16.mxu0 0
    %883 = vmatpush1.bf16.msra.mxu0 0
    %884 = vmatprep.subr.bf16.mxu0 0
    %885 = vmatpush1.bf16.msra.mxu0 0
    %886 = vmatprep.subr.bf16.mxu0 0
    %887 = vmatpush1.bf16.msra.mxu0 0
    %888 = vmatprep.subr.bf16.mxu0 0
    %889 = vmatpush1.bf16.msra.mxu0 0
    %890 = vmatprep.subr.bf16.mxu0 0
    %891 = vmatpush1.bf16.msra.mxu0 0
    %892 = vmatprep.subr.bf16.mxu0 0
    %893 = vmatpush1.bf16.msra.mxu0 0
    %894 = vmatprep.subr.bf16.mxu0 0
    %895 = vmatpush1.bf16.msra.mxu0 0
    %896 = vmatprep.subr.bf16.mxu0 0
    %897 = vmatpush1.bf16.msra.mxu0 0
    %898 = vmatprep.subr.bf16.mxu0 0
    %899 = vmatpush1.bf16.msra.mxu0 0
    %900 = vmatprep.subr.bf16.mxu0 0
    %901 = vmatpush1.bf16.msra.mxu0 0
    %902 = vmatprep.subr.bf16.mxu0 0
    %903 = vmatpush1.bf16.msra.mxu0 0
    %904 = vmatprep.subr.bf16.mxu0 0
    %905 = vmatpush1.bf16.msra.mxu0 0
    %906 = vmatprep.mubr.bf16.mxu0 0
    %907 = vmatmul.mubr.bf16.gmra.mrb[0].mxu0 %v870
    %v908 = vpop.f32.mrb[0].mxu0
    %v909 = vadd.f32 0.0, %v908
    %v910 = vpop.f32.mrb[0].mxu0
    %v911 = vpop.f32.mrb[0].mxu0
    %v912 = vpop.f32.mrb[0].mxu0
    %913 = vdwg.mxu0
    %v915 = vsel %vm133, %v597, 0
    %v917 = vsel %vm601, %v68, 0
    %919 = vmatprep.subr.bf16.mxu0 0
    %920 = vmatpush1.bf16.msra.mxu0 %v917
    %921 = vmatprep.subr.bf16.mxu0 0
    %922 = vmatpush1.bf16.msra.mxu0 0
    %923 = vmatprep.subr.bf16.mxu0 0
    %924 = vmatpush1.bf16.msra.mxu0 0
    %925 = vmatprep.subr.bf16.mxu0 0
    %926 = vmatpush1.bf16.msra.mxu0 0
    %927 = vmatprep.subr.bf16.mxu0 0
    %928 = vmatpush1.bf16.msra.mxu0 0
    %929 = vmatprep.subr.bf16.mxu0 0
    %930 = vmatpush1.bf16.msra.mxu0 0
    %931 = vmatprep.subr.bf16.mxu0 0
    %932 = vmatpush1.bf16.msra.mxu0 0
    %933 = vmatprep.subr.bf16.mxu0 0
    %934 = vmatpush1.bf16.msra.mxu0 0
    %935 = vmatprep.subr.bf16.mxu0 0
    %936 = vmatpush1.bf16.msra.mxu0 0
    %937 = vmatprep.subr.bf16.mxu0 0
    %938 = vmatpush1.bf16.msra.mxu0 0
    %939 = vmatprep.subr.bf16.mxu0 0
    %940 = vmatpush1.bf16.msra.mxu0 0
    %941 = vmatprep.subr.bf16.mxu0 0
    %942 = vmatpush1.bf16.msra.mxu0 0
    %943 = vmatprep.subr.bf16.mxu0 0
    %944 = vmatpush1.bf16.msra.mxu0 0
    %945 = vmatprep.subr.bf16.mxu0 0
    %946 = vmatpush1.bf16.msra.mxu0 0
    %947 = vmatprep.subr.bf16.mxu0 0
    %948 = vmatpush1.bf16.msra.mxu0 0
    %949 = vmatprep.subr.bf16.mxu0 0
    %950 = vmatpush1.bf16.msra.mxu0 0
    %951 = vmatprep.mubr.bf16.mxu0 0
    %952 = vmatmul.mubr.bf16.gmra.mrb[0].mxu0 %v915
    %v953 = vpop.f32.mrb[0].mxu0
    %v954 = vadd.f32 0.0, %v953
    %v955 = vpop.f32.mrb[0].mxu0
    %v956 = vpop.f32.mrb[0].mxu0
    %v957 = vpop.f32.mrb[0].mxu0
    %958 = vdwg.mxu0
    %v959 = vpack.c.bf16 %v639, %v639
    %v960 = vpack.c.bf16 %v684, %v684
    %v961 = vpack.c.bf16 %v729, %v729
    %v962 = vpack.c.bf16 %v774, %v774
    %v963 = vpack.c.bf16 %v819, %v819
    %v964 = vpack.c.bf16 %v864, %v864
    %v965 = vpack.c.bf16 %v909, %v909
    %v966 = vpack.c.bf16 %v954, %v954
    %v967 = vld [vmem:[%s3] sm:$0xf]
    %v968 = vld [vmem:[%s3 + $0x4] sm:$0xf]
    %v969 = vld [vmem:[%s3 + $0x8] sm:$0xf]
    %v970 = vld [vmem:[%s3 + $0xc] sm:$0xf]
    %v973 = vunpack.c.l.b16 %v960
    %v974 = vunpack.c.l.b16 %v964
    %v975 = vpack.c.b16 %v974, %v973
    %v977 = vsel %vm133, %v975, 0
    %v980 = vsel %vm601, %v968, 0
    %982 = vmatprep.subr.bf16.mxu0 0
    %983 = vmatpush1.bf16.msra.mxu0 %v980
    %984 = vmatprep.subr.bf16.mxu0 0
    %985 = vmatpush1.bf16.msra.mxu0 0
    %986 = vmatprep.subr.bf16.mxu0 0
    %987 = vmatpush1.bf16.msra.mxu0 0
    %988 = vmatprep.subr.bf16.mxu0 0
    %989 = vmatpush1.bf16.msra.mxu0 0
    %990 = vmatprep.subr.bf16.mxu0 0
    %991 = vmatpush1.bf16.msra.mxu0 0
    %992 = vmatprep.subr.bf16.mxu0 0
    %993 = vmatpush1.bf16.msra.mxu0 0
    %994 = vmatprep.subr.bf16.mxu0 0
    %995 = vmatpush1.bf16.msra.mxu0 0
    %996 = vmatprep.subr.bf16.mxu0 0
    %997 = vmatpush1.bf16.msra.mxu0 0
    %998 = vmatprep.subr.bf16.mxu0 0
    %999 = vmatpush1.bf16.msra.mxu0 0
    %1000 = vmatprep.subr.bf16.mxu0 0
    %1001 = vmatpush1.bf16.msra.mxu0 0
    %1002 = vmatprep.subr.bf16.mxu0 0
    %1003 = vmatpush1.bf16.msra.mxu0 0
    %1004 = vmatprep.subr.bf16.mxu0 0
    %1005 = vmatpush1.bf16.msra.mxu0 0
    %1006 = vmatprep.subr.bf16.mxu0 0
    %1007 = vmatpush1.bf16.msra.mxu0 0
    %1008 = vmatprep.subr.bf16.mxu0 0
    %1009 = vmatpush1.bf16.msra.mxu0 0
    %1010 = vmatprep.subr.bf16.mxu0 0
    %1011 = vmatpush1.bf16.msra.mxu0 0
    %1012 = vmatprep.subr.bf16.mxu0 0
    %1013 = vmatpush1.bf16.msra.mxu0 0
    %1014 = vmatprep.mubr.bf16.mxu0 0
    %1015 = vmatmul.mubr.bf16.gmra.mrb[0].mxu0 %v977
    %v1016 = vpop.f32.mrb[0].mxu0
    %v1017 = vadd.f32 0.0, %v1016
    %v1018 = vpop.f32.mrb[0].mxu0
    %v1019 = vpop.f32.mrb[0].mxu0
    %v1020 = vadd.f32 0.0, %v1019
    %v1021 = vpop.f32.mrb[0].mxu0
    %1022 = vdwg.mxu0
    %v1025 = vunpack.c.l.b16 %v959
    %v1026 = vunpack.c.l.b16 %v963
    %v1027 = vpack.c.b16 %v1026, %v1025
    %v1029 = vsel %vm133, %v1027, 0
    %v1032 = vsel %vm601, %v967, 0
    %1034 = vmatprep.subr.bf16.mxu0 0
    %1035 = vmatpush1.bf16.msra.mxu0 %v1032
    %1036 = vmatprep.subr.bf16.mxu0 0
    %1037 = vmatpush1.bf16.msra.mxu0 0
    %1038 = vmatprep.subr.bf16.mxu0 0
    %1039 = vmatpush1.bf16.msra.mxu0 0
    %1040 = vmatprep.subr.bf16.mxu0 0
    %1041 = vmatpush1.bf16.msra.mxu0 0
    %1042 = vmatprep.subr.bf16.mxu0 0
    %1043 = vmatpush1.bf16.msra.mxu0 0
    %1044 = vmatprep.subr.bf16.mxu0 0
    %1045 = vmatpush1.bf16.msra.mxu0 0
    %1046 = vmatprep.subr.bf16.mxu0 0
    %1047 = vmatpush1.bf16.msra.mxu0 0
    %1048 = vmatprep.subr.bf16.mxu0 0
    %1049 = vmatpush1.bf16.msra.mxu0 0
    %1050 = vmatprep.subr.bf16.mxu0 0
    %1051 = vmatpush1.bf16.msra.mxu0 0
    %1052 = vmatprep.subr.bf16.mxu0 0
    %1053 = vmatpush1.bf16.msra.mxu0 0
    %1054 = vmatprep.subr.bf16.mxu0 0
    %1055 = vmatpush1.bf16.msra.mxu0 0
    %1056 = vmatprep.subr.bf16.mxu0 0
    %1057 = vmatpush1.bf16.msra.mxu0 0
    %1058 = vmatprep.subr.bf16.mxu0 0
    %1059 = vmatpush1.bf16.msra.mxu0 0
    %1060 = vmatprep.subr.bf16.mxu0 0
    %1061 = vmatpush1.bf16.msra.mxu0 0
    %1062 = vmatprep.subr.bf16.mxu0 0
    %1063 = vmatpush1.bf16.msra.mxu0 0
    %1064 = vmatprep.subr.bf16.mxu0 0
    %1065 = vmatpush1.bf16.msra.mxu0 0
    %1066 = vmatprep.mubr.bf16.mxu0 0
    %1067 = vmatmul.mubr.bf16.gmra.mrb[0].mxu0 %v1029
    %v1068 = vpop.f32.mrb[0].mxu0
    %v1069 = vadd.f32 %v1017, %v1068
    %v1070 = vpop.f32.mrb[0].mxu0
    %v1071 = vpop.f32.mrb[0].mxu0
    %v1072 = vadd.f32 %v1020, %v1071
    %v1073 = vpop.f32.mrb[0].mxu0
    %1074 = vdwg.mxu0
    %v1077 = vunpack.c.l.b16 %v961
    %v1078 = vunpack.c.l.b16 %v965
    %v1079 = vpack.c.b16 %v1078, %v1077
    %v1081 = vsel %vm133, %v1079, 0
    %v1084 = vsel %vm601, %v969, 0
    %1086 = vmatprep.subr.bf16.mxu0 0
    %1087 = vmatpush1.bf16.msra.mxu0 %v1084
    %1088 = vmatprep.subr.bf16.mxu0 0
    %1089 = vmatpush1.bf16.msra.mxu0 0
    %1090 = vmatprep.subr.bf16.mxu0 0
    %1091 = vmatpush1.bf16.msra.mxu0 0
    %1092 = vmatprep.subr.bf16.mxu0 0
    %1093 = vmatpush1.bf16.msra.mxu0 0
    %1094 = vmatprep.subr.bf16.mxu0 0
    %1095 = vmatpush1.bf16.msra.mxu0 0
    %1096 = vmatprep.subr.bf16.mxu0 0
    %1097 = vmatpush1.bf16.msra.mxu0 0
    %1098 = vmatprep.subr.bf16.mxu0 0
    %1099 = vmatpush1.bf16.msra.mxu0 0
    %1100 = vmatprep.subr.bf16.mxu0 0
    %1101 = vmatpush1.bf16.msra.mxu0 0
    %1102 = vmatprep.subr.bf16.mxu0 0
    %1103 = vmatpush1.bf16.msra.mxu0 0
    %1104 = vmatprep.subr.bf16.mxu0 0
    %1105 = vmatpush1.bf16.msra.mxu0 0
    %1106 = vmatprep.subr.bf16.mxu0 0
    %1107 = vmatpush1.bf16.msra.mxu0 0
    %1108 = vmatprep.subr.bf16.mxu0 0
    %1109 = vmatpush1.bf16.msra.mxu0 0
    %1110 = vmatprep.subr.bf16.mxu0 0
    %1111 = vmatpush1.bf16.msra.mxu0 0
    %1112 = vmatprep.subr.bf16.mxu0 0
    %1113 = vmatpush1.bf16.msra.mxu0 0
    %1114 = vmatprep.subr.bf16.mxu0 0
    %1115 = vmatpush1.bf16.msra.mxu0 0
    %1116 = vmatprep.subr.bf16.mxu0 0
    %1117 = vmatpush1.bf16.msra.mxu0 0
    %1118 = vmatprep.mubr.bf16.mxu0 0
    %1119 = vmatmul.mubr.bf16.gmra.mrb[0].mxu0 %v1081
    %v1120 = vpop.f32.mrb[0].mxu0
    %v1121 = vadd.f32 0.0, %v1120
    %v1122 = vpop.f32.mrb[0].mxu0
    %v1123 = vpop.f32.mrb[0].mxu0
    %v1124 = vadd.f32 0.0, %v1123
    %v1125 = vpop.f32.mrb[0].mxu0
    %1126 = vdwg.mxu0
    %v1127 = vadd.f32 %v1069, %v1121
    %v1128 = vadd.f32 %v1072, %v1124
    %v1131 = vunpack.c.l.b16 %v962
    %v1132 = vunpack.c.l.b16 %v966
    %v1133 = vpack.c.b16 %v1132, %v1131
    %v1135 = vsel %vm133, %v1133, 0
    %v1138 = vsel %vm601, %v970, 0
    %1140 = vmatprep.subr.bf16.mxu0 0
    %1141 = vmatpush1.bf16.msra.mxu0 %v1138
    %1142 = vmatprep.subr.bf16.mxu0 0
    %1143 = vmatpush1.bf16.msra.mxu0 0
    %1144 = vmatprep.subr.bf16.mxu0 0
    %1145 = vmatpush1.bf16.msra.mxu0 0
    %1146 = vmatprep.subr.bf16.mxu0 0
    %1147 = vmatpush1.bf16.msra.mxu0 0
    %1148 = vmatprep.subr.bf16.mxu0 0
    %1149 = vmatpush1.bf16.msra.mxu0 0
    %1150 = vmatprep.subr.bf16.mxu0 0
    %1151 = vmatpush1.bf16.msra.mxu0 0
    %1152 = vmatprep.subr.bf16.mxu0 0
    %1153 = vmatpush1.bf16.msra.mxu0 0
    %1154 = vmatprep.subr.bf16.mxu0 0
    %1155 = vmatpush1.bf16.msra.mxu0 0
    %1156 = vmatprep.subr.bf16.mxu0 0
    %1157 = vmatpush1.bf16.msra.mxu0 0
    %1158 = vmatprep.subr.bf16.mxu0 0
    %1159 = vmatpush1.bf16.msra.mxu0 0
    %1160 = vmatprep.subr.bf16.mxu0 0
    %1161 = vmatpush1.bf16.msra.mxu0 0
    %1162 = vmatprep.subr.bf16.mxu0 0
    %1163 = vmatpush1.bf16.msra.mxu0 0
    %1164 = vmatprep.subr.bf16.mxu0 0
    %1165 = vmatpush1.bf16.msra.mxu0 0
    %1166 = vmatprep.subr.bf16.mxu0 0
    %1167 = vmatpush1.bf16.msra.mxu0 0
    %1168 = vmatprep.subr.bf16.mxu0 0
    %1169 = vmatpush1.bf16.msra.mxu0 0
    %1170 = vmatprep.subr.bf16.mxu0 0
    %1171 = vmatpush1.bf16.msra.mxu0 0
    %1172 = vmatprep.mubr.bf16.mxu0 0
    %1173 = vmatmul.mubr.bf16.gmra.mrb[0].mxu0 %v1135
    %v1174 = vpop.f32.mrb[0].mxu0
    %v1175 = vadd.f32 0.0, %v1174
    %v1176 = vpop.f32.mrb[0].mxu0
    %v1177 = vpop.f32.mrb[0].mxu0
    %v1178 = vadd.f32 0.0, %v1177
    %v1179 = vpop.f32.mrb[0].mxu0
    %1180 = vdwg.mxu0
    %v1181 = vadd.f32 %v1127, %v1175
    %v1182 = vadd.f32 %v1128, %v1178
    %v1183 = vld [vmem:[%s4] sm:$0x1]
    %v1185 = vlaneseq
    %v1186 = vshrl.u32 %v1185, 7
    %v1187 = vsub.s32 0, %v1186
    %v1188 = vrot.slane %v1183, %v1187
    %v1190 = vadd.f32 %v1181, %v1188
    %v1191 = vadd.f32 %v1182, %v1188
    %v1192 = vld [vmem:[%s0] sm:$0xff]
    %v1193 = vld [vmem:[%s0 + $0x8] sm:$0xff]
    %v1194 = vadd.f32 %v1190, %v1192
    %v1195 = vadd.f32 %v1191, %v1193
    %vm1196 = vcmask 261120
    %v1197 = vsel %vm1196, %v1194, 0.0
    %1198 = vadd.xlane.f32.xlu0 %v1197
    %v1199 = vpop.xlane.xlu0 %1198
    %v1200 = vsel %vm1196, %v1195, 0.0
    %1201 = vadd.xlane.f32.xlu0 %v1200
    %v1202 = vpop.xlane.xlu0 %1201
    %v1203 = vmul.f32 %v1199, 0.03125
    %v1204 = vmul.f32 %v1202, 0.03125
    %v1205 = vmul.f32 %v1194, %v1194
    %v1206 = vmul.f32 %v1195, %v1195
    %v1207 = vsel %vm1196, %v1205, 0.0
    %1208 = vadd.xlane.f32.xlu0 %v1207
    %v1209 = vpop.xlane.xlu0 %1208
    %v1210 = vsel %vm1196, %v1206, 0.0
    %1211 = vadd.xlane.f32.xlu0 %v1210
    %v1212 = vpop.xlane.xlu0 %1211
    %v1213 = vmul.f32 %v1209, 0.03125
    %v1214 = vmul.f32 %v1212, 0.03125
    %v1215 = vmul.f32 %v1203, %v1203
    %v1216 = vmul.f32 %v1204, %v1204
    %v1217 = vsub.f32 %v1213, %v1215
    %v1218 = vsub.f32 %v1214, %v1216
    %v1219 = vmax.f32 %v1217, 0.0
    %v1220 = vmax.f32 %v1218, 0.0
    %v1221 = vsub.f32 %v1194, %v1203
    %v1222 = vsub.f32 %v1195, %v1204
    %v1223 = vadd.f32 %v1219, 1e-05
    %v1224 = vadd.f32 %v1220, 1e-05
    %v1225 = vrsqrt.pop %v1223
    %v1226 = vrsqrt.pop %v1224
    %v1227 = vmul.f32 %v1221, %v1225
    %v1228 = vmul.f32 %v1222, %v1226
    %v1229 = vld [vmem:[%s5] sm:$0x1]
    %v1231 = vlaneseq
    %v1232 = vshrl.u32 %v1231, 7
    %v1233 = vsub.s32 0, %v1232
    %v1234 = vrot.slane %v1229, %v1233
    %v1236 = vmul.f32 %v1227, %v1234
    %v1237 = vmul.f32 %v1228, %v1234
    %v1238 = vld [vmem:[%s6] sm:$0x1]
    %v1240 = vlaneseq
    %v1241 = vshrl.u32 %v1240, 7
    %v1242 = vsub.s32 0, %v1241
    %v1243 = vrot.slane %v1238, %v1242
    %v1245 = vadd.f32 %v1236, %v1243
    %v1246 = vadd.f32 %v1237, %v1243
    %v1247 = vpack.c.bf16 %v1246, %v1245
    %v1248 = vld [vmem:[%s7] sm:$0xf]
    %v1249 = vld [vmem:[%s7 + $0x4] sm:$0xf]
    %v1250 = vld [vmem:[%s7 + $0x8] sm:$0xf]
    %v1251 = vld [vmem:[%s7 + $0xc] sm:$0xf]
    %v1252 = vld [vmem:[%s8] sm:$0x1]
    %v1254 = vlaneseq
    %v1255 = vshrl.u32 %v1254, 7
    %v1256 = vsub.s32 0, %v1255
    %v1257 = vrot.slane %v1252, %v1256
    %v1263 = vunpack.c.l.b16 %v1248
    %v1264 = vunpack.c.l.b16 %v1249
    %v1265 = vunpack.c.l.b16 %v1250
    %v1266 = vunpack.c.l.b16 %v1251
    %v1267 = vpack.c.b16 %v1264, %v1263
    %v1268 = vpack.c.b16 %v1266, %v1265
    %v1272 = vsel %vm1196, %v1247, 0
    %1274 = vmatprep.subr.bf16.mxu0 0
    %1275 = vmatpush1.bf16.msra.mxu0 %v1267
    %1276 = vmatprep.subr.bf16.mxu0 0
    %1277 = vmatpush1.bf16.msra.mxu0 %v1268
    %1278 = vmatprep.subr.bf16.mxu0 0
    %1279 = vmatpush1.bf16.msra.mxu0 0
    %1280 = vmatprep.subr.bf16.mxu0 0
    %1281 = vmatpush1.bf16.msra.mxu0 0
    %1282 = vmatprep.subr.bf16.mxu0 0
    %1283 = vmatpush1.bf16.msra.mxu0 0
    %1284 = vmatprep.subr.bf16.mxu0 0
    %1285 = vmatpush1.bf16.msra.mxu0 0
    %1286 = vmatprep.subr.bf16.mxu0 0
    %1287 = vmatpush1.bf16.msra.mxu0 0
    %1288 = vmatprep.subr.bf16.mxu0 0
    %1289 = vmatpush1.bf16.msra.mxu0 0
    %1290 = vmatprep.subr.bf16.mxu0 0
    %1291 = vmatpush1.bf16.msra.mxu0 0
    %1292 = vmatprep.subr.bf16.mxu0 0
    %1293 = vmatpush1.bf16.msra.mxu0 0
    %1294 = vmatprep.subr.bf16.mxu0 0
    %1295 = vmatpush1.bf16.msra.mxu0 0
    %1296 = vmatprep.subr.bf16.mxu0 0
    %1297 = vmatpush1.bf16.msra.mxu0 0
    %1298 = vmatprep.subr.bf16.mxu0 0
    %1299 = vmatpush1.bf16.msra.mxu0 0
    %1300 = vmatprep.subr.bf16.mxu0 0
    %1301 = vmatpush1.bf16.msra.mxu0 0
    %1302 = vmatprep.subr.bf16.mxu0 0
    %1303 = vmatpush1.bf16.msra.mxu0 0
    %1304 = vmatprep.subr.bf16.mxu0 0
    %1305 = vmatpush1.bf16.msra.mxu0 0
    %1306 = vmatprep.mubr.bf16.mxu0 0
    %1307 = vmatmul.mubr.bf16.gmra.mrb[0].mxu0 %v1272
    %v1308 = vpop.f32.mrb[0].mxu0
    %v1309 = vadd.f32 %v1257, %v1308
    %v1310 = vpop.f32.mrb[0].mxu0
    %v1311 = vpop.f32.mrb[0].mxu0
    %v1312 = vadd.f32 %v1257, %v1311
    %v1313 = vpop.f32.mrb[0].mxu0
    %1314 = vdwg.mxu0
    %v1315 = vmax.f32 %v1309, 0.0
    %v1316 = vmax.f32 %v1312, 0.0
    %v1317 = vpack.c.bf16 %v1316, %v1315
    %v1318 = vld [vmem:[%s9] sm:$0xf]
    %v1319 = vld [vmem:[%s9 + $0x4] sm:$0xf]
    %v1320 = vld [vmem:[%s9 + $0x8] sm:$0xf]
    %v1321 = vld [vmem:[%s9 + $0xc] sm:$0xf]
    %v1322 = vld [vmem:[%s9 + $0x10] sm:$0xf]
    %v1323 = vld [vmem:[%s9 + $0x14] sm:$0xf]
    %v1324 = vld [vmem:[%s9 + $0x18] sm:$0xf]
    %v1325 = vld [vmem:[%s9 + $0x1c] sm:$0xf]
    %v1326 = vld [vmem:[%s9 + $0x20] sm:$0xf]
    %v1327 = vld [vmem:[%s9 + $0x24] sm:$0xf]
    %v1328 = vld [vmem:[%s9 + $0x28] sm:$0xf]
    %v1329 = vld [vmem:[%s9 + $0x2c] sm:$0xf]
    %v1330 = vld [vmem:[%s9 + $0x30] sm:$0xf]
    %v1331 = vld [vmem:[%s9 + $0x34] sm:$0xf]
    %v1332 = vld [vmem:[%s9 + $0x38] sm:$0xf]
    %v1333 = vld [vmem:[%s9 + $0x3c] sm:$0xf]
    %v1334 = vld [vmem:[%s10] sm:$0x1]
    %v1336 = vlaneseq
    %v1337 = vshrl.u32 %v1336, 7
    %v1338 = vsub.s32 0, %v1337
    %v1339 = vrot.slane %v1334, %v1338
    %v1357 = vunpack.c.l.b16 %v1318
    %v1358 = vunpack.c.l.b16 %v1319
    %v1359 = vunpack.c.l.b16 %v1320
    %v1360 = vunpack.c.l.b16 %v1321
    %v1361 = vunpack.c.l.b16 %v1322
    %v1362 = vunpack.c.l.b16 %v1323
    %v1363 = vunpack.c.l.b16 %v1324
    %v1364 = vunpack.c.l.b16 %v1325
    %v1365 = vunpack.c.l.b16 %v1326
    %v1366 = vunpack.c.l.b16 %v1327
    %v1367 = vunpack.c.l.b16 %v1328
    %v1368 = vunpack.c.l.b16 %v1329
    %v1369 = vunpack.c.l.b16 %v1330
    %v1370 = vunpack.c.l.b16 %v1331
    %v1371 = vunpack.c.l.b16 %v1332
    %v1372 = vunpack.c.l.b16 %v1333
    %v1373 = vpack.c.b16 %v1358, %v1357
    %v1374 = vpack.c.b16 %v1360, %v1359
    %v1375 = vpack.c.b16 %v1362, %v1361
    %v1376 = vpack.c.b16 %v1364, %v1363
    %v1377 = vpack.c.b16 %v1366, %v1365
    %v1378 = vpack.c.b16 %v1368, %v1367
    %v1379 = vpack.c.b16 %v1370, %v1369
    %v1380 = vpack.c.b16 %v1372, %v1371
    %1389 = vmatprep.subr.bf16.mxu0 0
    %1390 = vmatpush1.bf16.msra.mxu0 %v1373
    %1391 = vmatprep.subr.bf16.mxu0 0
    %1392 = vmatpush1.bf16.msra.mxu0 %v1374
    %1393 = vmatprep.subr.bf16.mxu0 0
    %1394 = vmatpush1.bf16.msra.mxu0 %v1375
    %1395 = vmatprep.subr.bf16.mxu0 0
    %1396 = vmatpush1.bf16.msra.mxu0 %v1376
    %1397 = vmatprep.subr.bf16.mxu0 0
    %1398 = vmatpush1.bf16.msra.mxu0 %v1377
    %1399 = vmatprep.subr.bf16.mxu0 0
    %1400 = vmatpush1.bf16.msra.mxu0 %v1378
    %1401 = vmatprep.subr.bf16.mxu0 0
    %1402 = vmatpush1.bf16.msra.mxu0 %v1379
    %1403 = vmatprep.subr.bf16.mxu0 0
    %1404 = vmatpush1.bf16.msra.mxu0 %v1380
    %1405 = vmatprep.subr.bf16.mxu0 0
    %1406 = vmatpush1.bf16.msra.mxu0 0
    %1407 = vmatprep.subr.bf16.mxu0 0
    %1408 = vmatpush1.bf16.msra.mxu0 0
    %1409 = vmatprep.subr.bf16.mxu0 0
    %1410 = vmatpush1.bf16.msra.mxu0 0
    %1411 = vmatprep.subr.bf16.mxu0 0
    %1412 = vmatpush1.bf16.msra.mxu0 0
    %1413 = vmatprep.subr.bf16.mxu0 0
    %1414 = vmatpush1.bf16.msra.mxu0 0
    %1415 = vmatprep.subr.bf16.mxu0 0
    %1416 = vmatpush1.bf16.msra.mxu0 0
    %1417 = vmatprep.subr.bf16.mxu0 0
    %1418 = vmatpush1.bf16.msra.mxu0 0
    %1419 = vmatprep.subr.bf16.mxu0 0
    %1420 = vmatpush1.bf16.msra.mxu0 0
    %1421 = vmatprep.mubr.bf16.mxu0 0
    %1422 = vmatmul.mubr.bf16.gmra.mrb[0].mxu0 %v1317
    %v1423 = vpop.f32.mrb[0].mxu0
    %v1424 = vadd.f32 %v1339, %v1423
    %v1425 = vpop.f32.mrb[0].mxu0
    %v1426 = vpop.f32.mrb[0].mxu0
    %v1427 = vadd.f32 %v1339, %v1426
    %v1428 = vpop.f32.mrb[0].mxu0
    %1429 = vdwg.mxu0
    %v1430 = vadd.f32 %v1424, %v1245
    %v1431 = vadd.f32 %v1427, %v1246
    %v1432 = vsel %vm1196, %v1430, 0.0
    %1433 = vadd.xlane.f32.xlu0 %v1432
    %v1434 = vpop.xlane.xlu0 %1433
    %v1435 = vsel %vm1196, %v1431, 0.0
    %1436 = vadd.xlane.f32.xlu0 %v1435
    %v1437 = vpop.xlane.xlu0 %1436
    %v1438 = vmul.f32 %v1434, 0.03125
    %v1439 = vmul.f32 %v1437, 0.03125
    %v1440 = vmul.f32 %v1430, %v1430
    %v1441 = vmul.f32 %v1431, %v1431
    %v1442 = vsel %vm1196, %v1440, 0.0
    %1443 = vadd.xlane.f32.xlu0 %v1442
    %v1444 = vpop.xlane.xlu0 %1443
    %v1445 = vsel %vm1196, %v1441, 0.0
    %1446 = vadd.xlane.f32.xlu0 %v1445
    %v1447 = vpop.xlane.xlu0 %1446
    %v1448 = vmul.f32 %v1444, 0.03125
    %v1449 = vmul.f32 %v1447, 0.03125
    %v1450 = vmul.f32 %v1438, %v1438
    %v1451 = vmul.f32 %v1439, %v1439
    %v1452 = vsub.f32 %v1448, %v1450
    %v1453 = vsub.f32 %v1449, %v1451
    %v1454 = vmax.f32 %v1452, 0.0
    %v1455 = vmax.f32 %v1453, 0.0
    %v1456 = vsub.f32 %v1430, %v1438
    %v1457 = vsub.f32 %v1431, %v1439
    %v1458 = vadd.f32 %v1454, 1e-05
    %v1459 = vadd.f32 %v1455, 1e-05
    %v1460 = vrsqrt.pop %v1458
    %v1461 = vrsqrt.pop %v1459
    %v1462 = vmul.f32 %v1456, %v1460
    %v1463 = vmul.f32 %v1457, %v1461
    %v1464 = vld [vmem:[%s11] sm:$0x1]
    %v1466 = vlaneseq
    %v1467 = vshrl.u32 %v1466, 7
    %v1468 = vsub.s32 0, %v1467
    %v1469 = vrot.slane %v1464, %v1468
    %v1471 = vmul.f32 %v1462, %v1469
    %v1472 = vmul.f32 %v1463, %v1469
    %v1473 = vld [vmem:[%s12] sm:$0x1]
    %v1475 = vlaneseq
    %v1476 = vshrl.u32 %v1475, 7
    %v1477 = vsub.s32 0, %v1476
    %v1478 = vrot.slane %v1473, %v1477
    %v1480 = vadd.f32 %v1471, %v1478
    %v1481 = vadd.f32 %v1472, %v1478
    %1482 = vst.msk [vmem:[#allocation5] sm:$0xff] %vm1196, %v1480
    %1483 = vst.msk [vmem:[#allocation5 + $0x8] sm:$0xff] %vm1196, %v1481
    // Predicated region
    $region58: #{tpu_custom_call.1} parent=1 // pred_check
      _
    $region59: #{tpu_custom_call.1} parent=1 // pred_check_branch
      %1485 = sbr.rel (0) target = $region61
    $region60: #{tpu_custom_call.1} parent=1 // pred_region
      %s1487 = ssub.s32 256, 256
      %1488 = vsyncadd [#allocation4], %s1487
      %s1489 = sshll.u32 [#allocation5], 4
      %s1490 = int_to_ptr.vmem [resolvable:$true] %s1489
      %1495 = dma.vmem_to_hbm [thread:$0]  %s1490, 256, %s13, [#allocation4], 128, 128, 8
    $region61: #{tpu_custom_call.1} parent=1 // pred_fallthru
      _
    // Predicated region
    $region62: #{tpu_custom_call.1} parent=1 // pred_check
      _
    $region63: #{tpu_custom_call.1} parent=1 // pred_check_branch
      %1497 = sbr.rel (0) target = $region65
    $region64: #{tpu_custom_call.1} parent=1 // pred_region
      %1498 = dma.done [#allocation4], 256
    $region65: #{tpu_custom_call.1} parent=1 // pred_fallthru
      _
    %1499 = vsyncpa [#allocation3], 1
    %1500 = vsyncpa [#allocation4], 1

</llo_original>
